<compile_context>
chip_gen: v7x
topology: tpu7x:2x2x1
jax: 0.10.0
libtpu: 0.0.40
codegen_flags: <defaults>
</compile_context>

<pallas_src>
import functools

import numpy as np

import jax
import jax.numpy as jnp
from jax.experimental import pallas as pl
from jax.experimental.pallas import tpu as pltpu


# ------------------------------------------------------------------ kernel --

def _make_fused_kernel(num_layers, slope):
    """Build the fused discriminator kernel for `num_layers` conv+LeakyReLU
    stages followed by the fused (conv1 | conv2) head matmul.

    Ref order: x, (K_1, b_1), ..., (K_L, b_L), K_head, out
      x      : (bm, H*W*3)              flattened NHWC input rows (compute dtype)
      K_l    : (Din_l, Dout_l)          conv layer l as a dense matrix
      b_l    : (1, Dout_l) float32      bias pre-tiled to the flattened layout
      K_head : (Din_h, n_head_pad)      conv1|conv2 columns, zero padded to 128
      out    : (bm, n_head_pad) float32
    """

    def kernel(*refs):
        x_ref = refs[0]
        kh_ref = refs[-2]
        o_ref = refs[-1]
        compute_dtype = x_ref.dtype

        h = x_ref[...]
        for l in range(num_layers):
            k_ref = refs[1 + 2 * l]
            b_ref = refs[2 + 2 * l]
            acc = jnp.dot(h, k_ref[...], preferred_element_type=jnp.float32)
            acc = acc + b_ref[...]                           # (1, N) row bcast
            acc = jnp.where(acc >= 0.0, acc, slope * acc)    # LeakyReLU(0.01)
            h = acc.astype(compute_dtype)                    # stays in VMEM/vregs

        # conv1 (out_src) + conv2 (out_cls) fused, no bias, no activation.
        o_ref[...] = jnp.dot(h, kh_ref[...], preferred_element_type=jnp.float32)

    return kernel


def _fused_forward_call(x_mat, prep):
    """One pallas_call for the entire discriminator forward."""
    layers = prep["layers"]          # list of (K_l, b_l) jnp arrays
    kh = prep["kh"]
    B, d0 = x_mat.shape
    n_out = kh.shape[1]

    # Batch-row tile.  At B=2 this is the whole batch (grid=(1,)); for large
    # batches the "parallel" grid axis lets Mosaic shard rows across v7x's TCs.
    bm = B if B <= 256 else 256
    grid = (pl.cdiv(B, bm),)

    operands = [x_mat]
    in_specs = [pl.BlockSpec((bm, d0), lambda i: (i, 0))]
    flops = 0
    for (k, b) in layers:
        operands += [k, b]
        in_specs += [pl.BlockSpec(k.shape, lambda i: (0, 0)),
                     pl.BlockSpec(b.shape, lambda i: (0, 0))]
        flops += 2 * B * k.shape[0] * k.shape[1]
    operands.append(kh)
    in_specs.append(pl.BlockSpec(kh.shape, lambda i: (0, 0)))
    flops += 2 * B * kh.shape[0] * kh.shape[1]

    bytes_accessed = int(
        sum(int(np.prod(a.shape)) * a.dtype.itemsize for a in operands)
        + B * n_out * 4)

    kernel = _make_fused_kernel(len(layers), slope=0.01)
    return pl.pallas_call(
        kernel,
        out_shape=jax.ShapeDtypeStruct((B, n_out), jnp.float32),
        grid=grid,
        in_specs=in_specs,
        out_specs=pl.BlockSpec((bm, n_out), lambda i: (i, 0)),
        compiler_params=pltpu.CompilerParams(
            dimension_semantics=("parallel",)),
        cost_estimate=pl.CostEstimate(
            flops=int(flops), transcendentals=0, bytes_accessed=bytes_accessed),
    )(*operands)


# --------------------------------------------------- weight prep (hoisted) --

def _conv_as_dense(w_oihw, H, W, stride, pad):
    """Lower a conv (OIHW weights, PyTorch semantics) to a dense matrix acting
    on the per-sample flattened NHWC activation (channels fastest).

    Returns (mat (H*W*C_in, Ho*Wo*C_out) float32, Ho, Wo).  Built once with
    numpy at prep time — never on the forward hot path.
    """
    w = np.asarray(w_oihw, np.float32)
    C_out, C_in, kH, kW = w.shape
    Ho = (H + 2 * pad - kH) // stride + 1
    Wo = (W + 2 * pad - kW) // stride + 1
    mat = np.zeros((H * W * C_in, Ho * Wo * C_out), np.float32)
    for yo in range(Ho):
        for xo in range(Wo):
            ob = (yo * Wo + xo) * C_out
            for ky in range(kH):
                iy = yo * stride + ky - pad
                if iy < 0 or iy >= H:
                    continue
                for kx in range(kW):
                    ix = xo * stride + kx - pad
                    if ix < 0 or ix >= W:
                        continue
                    ib = (iy * W + ix) * C_in
                    mat[ib:ib + C_in, ob:ob + C_out] += w[:, :, ky, kx].T
    return mat, Ho, Wo


def prepare_pallas_params(params, image_size, compute_dtype=jnp.float32):
    """Hoist all weight layout work out of the forward: densify every conv,
    pre-tile biases to the flattened layout, fuse + lane-pad the two heads."""
    H = W = image_size
    layers = []
    for (w, b) in params["main"]:
        mat, Ho, Wo = _conv_as_dense(w, H, W, stride=2, pad=1)
        b_flat = np.tile(np.asarray(b, np.float32), Ho * Wo)[None, :]  # (1, N)
        layers.append((jnp.asarray(mat, compute_dtype),
                       jnp.asarray(b_flat, jnp.float32)))
        H, W = Ho, Wo

    # Heads: conv1 (k=4, s=1, p=1, no bias) and conv2 (k=ksz, s=1, p=0, no bias)
    k_src, Ho1, Wo1 = _conv_as_dense(params["conv1"], H, W, stride=1, pad=1)
    k_cls, _, _ = _conv_as_dense(params["conv2"], H, W, stride=1, pad=0)
    c_dim = params["conv2"].shape[0]
    n_src = Ho1 * Wo1
    kh = np.concatenate([k_src, k_cls], axis=1)
    n_pad = (-kh.shape[1]) % 128            # lane-dense, unmasked output store
    if n_pad:
        kh = np.concatenate(
            [kh, np.zeros((kh.shape[0], n_pad), np.float32)], axis=1)

    return {
        "dtype": compute_dtype,
        "layers": layers,
        "kh": jnp.asarray(kh, compute_dtype),
        "n_src": n_src,
        "src_hw": (Ho1, Wo1),
        "c_dim": c_dim,
    }


# ---------------------------------------------------------------- forward --

def discriminator_forward(prep, x_nchw):
    """x_nchw: (B, 3, H, W) float32.
    Returns (out_src (B, 1, Ho1, Wo1) NCHW, out_cls (B, c_dim))."""
    B = x_nchw.shape[0]
    # Layout plumbing (XLA): NCHW -> flattened NHWC rows so the feature dim
    # sits on the lane axis inside the kernel.
    x = jnp.transpose(x_nchw, (0, 2, 3, 1)).reshape(B, -1)
    x = x.astype(prep["dtype"])

    out = _fused_forward_call(x, prep)                 # (B, n_head_pad) float32

    n_src = prep["n_src"]
    Ho1, Wo1 = prep["src_hw"]
    c_dim = prep["c_dim"]
    out_src = out[:, :n_src].reshape(B, Ho1, Wo1, 1).transpose(0, 3, 1, 2)
    out_cls = out[:, n_src:n_src + c_dim]
    return out_src, out_cls


# ------------------------------------------------------------------ params --

def init_discriminator_params(key, image_size=16, conv_dim=8, c_dim=5, repeat_num=3):
    params = {"main": []}
    keys = jax.random.split(key, repeat_num + 2)
    in_c, out_c = 3, conv_dim
    for i in range(repeat_num):
        w = jax.random.normal(keys[i], (out_c, in_c, 4, 4), jnp.float32) * 0.05
        b = jax.random.normal(jax.random.fold_in(keys[i], 1), (out_c,), jnp.float32) * 0.05
        params["main"].append((w, b))
        in_c, out_c = out_c, out_c * 2
    curr_dim = in_c
    ksz = image_size // (2 ** repeat_num)
    params["conv1"] = jax.random.normal(keys[-2], (1, curr_dim, 4, 4), jnp.float32) * 0.05
    params["conv2"] = jax.random.normal(keys[-1], (c_dim, curr_dim, ksz, ksz), jnp.float32) * 0.05
    return params


# --------------------------------------------------------------- reference --

def _ref_conv(x_nchw, w, b, stride, pad):
    out = jax.lax.conv_general_dilated(
        x_nchw, w, (stride, stride), [(pad, pad), (pad, pad)],
        dimension_numbers=("NCHW", "OIHW", "NCHW"))
    if b is not None:
        out = out + b[None, :, None, None]
    return out


def reference_forward(params, x_nchw):
    h = x_nchw
    for (w, b) in params["main"]:
        h = _ref_conv(h, w, b, 2, 1)
        h = jnp.where(h >= 0.0, h, 0.01 * h)
    out_src = _ref_conv(h, params["conv1"], None, 1, 1)
    out_cls = _ref_conv(h, params["conv2"], None, 1, 0)
    return out_src, out_cls.reshape(out_cls.shape[0], out_cls.shape[1])


# --------------------------------------------------------------------- main --

if __name__ == "__main__":
    key = jax.random.PRNGKey(0)
    kp, kx = jax.random.split(key)

    # Small config consistent with the module: image_size=16, conv_dim=8,
    # c_dim=5, repeat_num=3  ->  final spatial 2x2, curr_dim=32, conv2 k=2.
    image_size, conv_dim, c_dim, repeat_num = 16, 8, 5, 3
    params = init_discriminator_params(kp, image_size, conv_dim, c_dim, repeat_num)
    x = jax.random.normal(kx, (2, 3, image_size, image_size), jnp.float32)

    ref_src, ref_cls = reference_forward(params, x)

    # ---- f32 path (tight correctness check) --------------------------------
    prep32 = prepare_pallas_params(params, image_size, compute_dtype=jnp.float32)
    fwd32 = jax.jit(functools.partial(discriminator_forward, prep32))
    out_src, out_cls = fwd32(x)
    out_src = jax.block_until_ready(out_src)
    out_cls = jax.block_until_ready(out_cls)
    assert out_src.shape == (2, 1, 1, 1), out_src.shape
    assert out_cls.shape == (2, 5), out_cls.shape
    assert jnp.allclose(out_src, ref_src, atol=5e-4, rtol=5e-4)
    assert jnp.allclose(out_cls, ref_cls, atol=5e-4, rtol=5e-4)

    # ---- bf16 operand path (v6e/v7x fast path, f32 accumulation) ------------
    prep16 = prepare_pallas_params(params, image_size, compute_dtype=jnp.bfloat16)
    fwd16 = jax.jit(functools.partial(discriminator_forward, prep16))
    out_src16, out_cls16 = fwd16(x)
    out_src16 = jax.block_until_ready(out_src16)
    out_cls16 = jax.block_until_ready(out_cls16)
    assert out_src16.shape == (2, 1, 1, 1)
    assert out_cls16.shape == (2, 5)
    assert jnp.allclose(out_src16, ref_src, atol=2e-2, rtol=1e-1)
    assert jnp.allclose(out_cls16, ref_cls, atol=2e-2, rtol=1e-1)

    print("KERNEL_OK")
</pallas_src>

<mosaic_0001>
module attributes {stable_mosaic.version = 11 : i64} {
  func.func @kernel(%arg0: i32, %arg1: memref<2x768xf32, #tpu.memory_space<vmem>>, %arg2: memref<768x512xf32, #tpu.memory_space<vmem>>, %arg3: memref<1x512xf32, #tpu.memory_space<vmem>>, %arg4: memref<512x256xf32, #tpu.memory_space<vmem>>, %arg5: memref<1x256xf32, #tpu.memory_space<vmem>>, %arg6: memref<256x128xf32, #tpu.memory_space<vmem>>, %arg7: memref<1x128xf32, #tpu.memory_space<vmem>>, %arg8: memref<128x128xf32, #tpu.memory_space<vmem>>, %arg9: memref<2x128xf32, #tpu.memory_space<vmem>>) attributes {dimension_semantics = [#tpu.dimension_semantics<parallel>], iteration_bounds = array<i64: 1>, scalar_prefetch = 0 : i64, scratch_operands = 0 : i64, tpu.core_type = #tpu.core_type<tc>, window_params = [{transform_indices = @transform_0, window_bounds = array<i64: 2, 768>}, {pipeline_mode = #tpu.pipeline_mode<synchronous>, transform_indices = @transform_1, window_bounds = array<i64: 768, 512>}, {pipeline_mode = #tpu.pipeline_mode<synchronous>, transform_indices = @transform_2, window_bounds = array<i64: 1, 512>}, {pipeline_mode = #tpu.pipeline_mode<synchronous>, transform_indices = @transform_3, window_bounds = array<i64: 512, 256>}, {pipeline_mode = #tpu.pipeline_mode<synchronous>, transform_indices = @transform_4, window_bounds = array<i64: 1, 256>}, {pipeline_mode = #tpu.pipeline_mode<synchronous>, transform_indices = @transform_5, window_bounds = array<i64: 256, 128>}, {pipeline_mode = #tpu.pipeline_mode<synchronous>, transform_indices = @transform_6, window_bounds = array<i64: 1, 128>}, {pipeline_mode = #tpu.pipeline_mode<synchronous>, transform_indices = @transform_7, window_bounds = array<i64: 128, 128>}, {transform_indices = @transform_8, window_bounds = array<i64: 2, 128>}]} {
    %c0 = arith.constant 0 : index
    %c0_0 = arith.constant 0 : index
    %0 = vector.load %arg1[%c0, %c0_0] : memref<2x768xf32, #tpu.memory_space<vmem>>, vector<2x768xf32>
    %c0_1 = arith.constant 0 : index
    %c0_2 = arith.constant 0 : index
    %1 = vector.load %arg2[%c0_1, %c0_2] : memref<768x512xf32, #tpu.memory_space<vmem>>, vector<768x512xf32>
    %cst = arith.constant dense<0.000000e+00> : vector<2x512xf32>
    %2 = tpu.matmul %0, %1, %cst {dimension_numbers = #tpu.dot_dimension_numbers<[1], [0], [0], [1], [0, 0, 1, 1], [], []>} : vector<2x768xf32>, vector<768x512xf32>, vector<2x512xf32> -> vector<2x512xf32>
    %c0_3 = arith.constant 0 : index
    %c0_4 = arith.constant 0 : index
    %3 = vector.load %arg3[%c0_3, %c0_4] : memref<1x512xf32, #tpu.memory_space<vmem>>, vector<1x512xf32>
    %4 = vector.broadcast %3 : vector<1x512xf32> to vector<2x512xf32>
    %5 = arith.addf %2, %4 : vector<2x512xf32>
    %cst_5 = arith.constant 0.000000e+00 : f32
    %6 = vector.broadcast %cst_5 : f32 to vector<2x512xf32>
    %7 = arith.cmpf oge, %5, %6 : vector<2x512xf32>
    %cst_6 = arith.constant 0.00999999977 : f32
    %8 = vector.broadcast %cst_6 : f32 to vector<2x512xf32>
    %9 = arith.mulf %8, %5 : vector<2x512xf32>
    %10 = arith.select %7, %5, %9 : vector<2x512xi1>, vector<2x512xf32>
    %c0_7 = arith.constant 0 : index
    %c0_8 = arith.constant 0 : index
    %11 = vector.load %arg4[%c0_7, %c0_8] : memref<512x256xf32, #tpu.memory_space<vmem>>, vector<512x256xf32>
    %cst_9 = arith.constant dense<0.000000e+00> : vector<2x256xf32>
    %12 = tpu.matmul %10, %11, %cst_9 {dimension_numbers = #tpu.dot_dimension_numbers<[1], [0], [0], [1], [0, 0, 1, 1], [], []>} : vector<2x512xf32>, vector<512x256xf32>, vector<2x256xf32> -> vector<2x256xf32>
    %c0_10 = arith.constant 0 : index
    %c0_11 = arith.constant 0 : index
    %13 = vector.load %arg5[%c0_10, %c0_11] : memref<1x256xf32, #tpu.memory_space<vmem>>, vector<1x256xf32>
    %14 = vector.broadcast %13 : vector<1x256xf32> to vector<2x256xf32>
    %15 = arith.addf %12, %14 : vector<2x256xf32>
    %cst_12 = arith.constant 0.000000e+00 : f32
    %16 = vector.broadcast %cst_12 : f32 to vector<2x256xf32>
    %17 = arith.cmpf oge, %15, %16 : vector<2x256xf32>
    %cst_13 = arith.constant 0.00999999977 : f32
    %18 = vector.broadcast %cst_13 : f32 to vector<2x256xf32>
    %19 = arith.mulf %18, %15 : vector<2x256xf32>
    %20 = arith.select %17, %15, %19 : vector<2x256xi1>, vector<2x256xf32>
    %c0_14 = arith.constant 0 : index
    %c0_15 = arith.constant 0 : index
    %21 = vector.load %arg6[%c0_14, %c0_15] : memref<256x128xf32, #tpu.memory_space<vmem>>, vector<256x128xf32>
    %cst_16 = arith.constant dense<0.000000e+00> : vector<2x128xf32>
    %22 = tpu.matmul %20, %21, %cst_16 {dimension_numbers = #tpu.dot_dimension_numbers<[1], [0], [0], [1], [0, 0, 1, 1], [], []>} : vector<2x256xf32>, vector<256x128xf32>, vector<2x128xf32> -> vector<2x128xf32>
    %c0_17 = arith.constant 0 : index
    %c0_18 = arith.constant 0 : index
    %23 = vector.load %arg7[%c0_17, %c0_18] : memref<1x128xf32, #tpu.memory_space<vmem>>, vector<1x128xf32>
    %24 = vector.broadcast %23 : vector<1x128xf32> to vector<2x128xf32>
    %25 = arith.addf %22, %24 : vector<2x128xf32>
    %cst_19 = arith.constant 0.000000e+00 : f32
    %26 = vector.broadcast %cst_19 : f32 to vector<2x128xf32>
    %27 = arith.cmpf oge, %25, %26 : vector<2x128xf32>
    %cst_20 = arith.constant 0.00999999977 : f32
    %28 = vector.broadcast %cst_20 : f32 to vector<2x128xf32>
    %29 = arith.mulf %28, %25 : vector<2x128xf32>
    %30 = arith.select %27, %25, %29 : vector<2x128xi1>, vector<2x128xf32>
    %c0_21 = arith.constant 0 : index
    %c0_22 = arith.constant 0 : index
    %31 = vector.load %arg8[%c0_21, %c0_22] : memref<128x128xf32, #tpu.memory_space<vmem>>, vector<128x128xf32>
    %cst_23 = arith.constant dense<0.000000e+00> : vector<2x128xf32>
    %32 = tpu.matmul %30, %31, %cst_23 {dimension_numbers = #tpu.dot_dimension_numbers<[1], [0], [0], [1], [0, 0, 1, 1], [], []>} : vector<2x128xf32>, vector<128x128xf32>, vector<2x128xf32> -> vector<2x128xf32>
    %c0_24 = arith.constant 0 : index
    %c0_25 = arith.constant 0 : index
    %33 = vector.load %arg9[%c0_24, %c0_25] : memref<2x128xf32, #tpu.memory_space<vmem>>, vector<2x128xf32>
    tpu.vector_store %arg9[%c0_24, %c0_25], %32 {strides = array<i32>} : memref<2x128xf32, #tpu.memory_space<vmem>>, vector<2x128xf32>,
    return
  }
  func.func @transform_0(%arg0: i32) -> (i32, i32) {
    %c0_i32 = arith.constant 0 : i32
    %c0_i32_0 = arith.constant 0 : i32
    return %arg0, %c0_i32 : i32, i32
  }
  func.func @transform_1(%arg0: i32) -> (i32, i32) {
    %c0_i32 = arith.constant 0 : i32
    %c0_i32_0 = arith.constant 0 : i32
    %c0_i32_1 = arith.constant 0 : i32
    return %c0_i32, %c0_i32_0 : i32, i32
  }
  func.func @transform_2(%arg0: i32) -> (i32, i32) {
    %c0_i32 = arith.constant 0 : i32
    %c0_i32_0 = arith.constant 0 : i32
    %c0_i32_1 = arith.constant 0 : i32
    return %c0_i32, %c0_i32_0 : i32, i32
  }
  func.func @transform_3(%arg0: i32) -> (i32, i32) {
    %c0_i32 = arith.constant 0 : i32
    %c0_i32_0 = arith.constant 0 : i32
    %c0_i32_1 = arith.constant 0 : i32
    return %c0_i32, %c0_i32_0 : i32, i32
  }
  func.func @transform_4(%arg0: i32) -> (i32, i32) {
    %c0_i32 = arith.constant 0 : i32
    %c0_i32_0 = arith.constant 0 : i32
    %c0_i32_1 = arith.constant 0 : i32
    return %c0_i32, %c0_i32_0 : i32, i32
  }
  func.func @transform_5(%arg0: i32) -> (i32, i32) {
    %c0_i32 = arith.constant 0 : i32
    %c0_i32_0 = arith.constant 0 : i32
    %c0_i32_1 = arith.constant 0 : i32
    return %c0_i32, %c0_i32_0 : i32, i32
  }
  func.func @transform_6(%arg0: i32) -> (i32, i32) {
    %c0_i32 = arith.constant 0 : i32
    %c0_i32_0 = arith.constant 0 : i32
    %c0_i32_1 = arith.constant 0 : i32
    return %c0_i32, %c0_i32_0 : i32, i32
  }
  func.func @transform_7(%arg0: i32) -> (i32, i32) {
    %c0_i32 = arith.constant 0 : i32
    %c0_i32_0 = arith.constant 0 : i32
    %c0_i32_1 = arith.constant 0 : i32
    return %c0_i32, %c0_i32_0 : i32, i32
  }
  func.func @transform_8(%arg0: i32) -> (i32, i32) {
    %c0_i32 = arith.constant 0 : i32
    %c0_i32_0 = arith.constant 0 : i32
    return %arg0, %c0_i32 : i32, i32
  }
}

</mosaic_0001>

<llo_original>
// kernel: discriminator_forward.1
$region0: #{discriminator_forward.1}
  #allocation0 [shape = 'u32[]', space=smem, size = 0x4, offset = 0x4, fixed_abs, tag = 'smem constant byte address 0x4 - core index']
  #allocation1 [shape = 'u32[144,128]{1,0:T(1,128)}', space=vmem, size = 0x12000, scoped, tag = 'internal scratch']
  %s0 = inlined_call_operand.vmem [shape: f32[2,768], index: 0, kind: input, shape index: {}]
  %s1 = inlined_call_operand.hbm [shape: f32[768,512], index: 1, kind: input, shape index: {}]
  %s2 = inlined_call_operand.hbm [shape: f32[1,512], index: 2, kind: input, shape index: {}]
  %s3 = inlined_call_operand.hbm [shape: f32[512,256], index: 3, kind: input, shape index: {}]
  %s4 = inlined_call_operand.hbm [shape: f32[1,256], index: 4, kind: input, shape index: {}]
  %s5 = inlined_call_operand.hbm [shape: f32[256,128], index: 5, kind: input, shape index: {}]
  %s6 = inlined_call_operand.hbm [shape: f32[1,128], index: 6, kind: input, shape index: {}]
  %s7 = inlined_call_operand.hbm [shape: f32[128,128], index: 7, kind: input, shape index: {}]
  %s8 = inlined_call_operand.vmem [shape: f32[2,128], index: 8, kind: output, shape index: {}]
  %s9 = sld [smem:[#allocation0]]
  $region70: #{discriminator_forward.1} parent=0
    _
  %s11 = ssub.s32 1, %s9
  %s12 = scalar_select 0, %s11, %s9
  $region1: #{discriminator_forward.1} parent=0
    #allocation2 [shape = 'u8[1572864]{0}', space=vmem, size = 0x180000, scoped, tag = 'input window, operand 1, single buffered']
    #allocation3 [shape = 's32[1]{0}', space=sflag, size = 0x4, scoped, tag = 'scoped memory for discriminator_forward.1']
    #allocation4 [shape = 'u8[2048]{0}', space=vmem, size = 0x800, scoped, tag = 'input window, operand 2, single buffered']
    #allocation5 [shape = 's32[1]{0}', space=sflag, size = 0x4, scoped, tag = 'scoped memory for discriminator_forward.1']
    #allocation6 [shape = 'u8[524288]{0}', space=vmem, size = 0x80000, scoped, tag = 'input window, operand 3, single buffered']
    #allocation7 [shape = 'u8[1024]{0}', space=vmem, size = 0x400, scoped, tag = 'input window, operand 4, single buffered']
    #allocation8 [shape = 's32[1]{0}', space=sflag, size = 0x4, scoped, tag = 'scoped memory for discriminator_forward.1']
    #allocation9 [shape = 'u8[131072]{0}', space=vmem, size = 0x20000, scoped, tag = 'input window, operand 5, single buffered']
    #allocation10 [shape = 'u8[512]{0}', space=vmem, size = 0x400, scoped, tag = 'input window, operand 6, single buffered']
    #allocation11 [shape = 's32[1]{0}', space=sflag, size = 0x4, scoped, tag = 'scoped memory for discriminator_forward.1']
    #allocation12 [shape = 'u8[65536]{0}', space=vmem, size = 0x10000, scoped, tag = 'input window, operand 7, single buffered']
    %13 = vsyncpa [#allocation3], 0
    %14 = vsyncpa [#allocation5], 0
    %15 = vsyncpa [#allocation8], 0
    %16 = vsyncpa [#allocation11], 0
    // Predicated region
    $region2: #{discriminator_forward.1} parent=1 // pred_check
      _
    $region3: #{discriminator_forward.1} parent=1 // pred_check_branch
      %18 = sbr.rel (0) target = $region5
    $region4: #{discriminator_forward.1} parent=1 // pred_region
      _
    $region5: #{discriminator_forward.1} parent=1 // pred_fallthru
      _
    // Predicated region
    $region6: #{discriminator_forward.1} parent=1 // pred_check
      _
    $region7: #{discriminator_forward.1} parent=1 // pred_check_branch
      %20 = sbr.rel (0) target = $region9
    $region8: #{discriminator_forward.1} parent=1 // pred_region
      %s22 = ssub.s32 49152, 49152
      %23 = vsyncadd [#allocation3], %s22
      %s24 = sshll.u32 [#allocation2], 4
      %s25 = int_to_ptr.vmem [resolvable:$true] %s24
      %30 = dma.hbm_to_vmem [thread:$0]  %s1, 49152, %s25, [#allocation3], 512, 512, 32
    $region9: #{discriminator_forward.1} parent=1 // pred_fallthru
      _
    // Predicated region
    $region10: #{discriminator_forward.1} parent=1 // pred_check
      _
    $region11: #{discriminator_forward.1} parent=1 // pred_check_branch
      %32 = sbr.rel (0) target = $region13
    $region12: #{discriminator_forward.1} parent=1 // pred_region
      %s34 = ssub.s32 64, 64
      %35 = vsyncadd [#allocation5], %s34
      %s37 = sshll.u32 [#allocation4], 4
      %s38 = int_to_ptr.vmem [resolvable:$true] %s37
      %40 = dma.hbm_to_vmem [thread:$0]  %s2, 64, %s38, [#allocation5]
    $region13: #{discriminator_forward.1} parent=1 // pred_fallthru
      _
    // Predicated region
    $region14: #{discriminator_forward.1} parent=1 // pred_check
      _
    $region15: #{discriminator_forward.1} parent=1 // pred_check_branch
      %42 = sbr.rel (0) target = $region17
    $region16: #{discriminator_forward.1} parent=1 // pred_region
      %s44 = ssub.s32 16384, 16384
      %45 = vsyncadd [#allocation5], %s44
      %s46 = sshll.u32 [#allocation6], 4
      %s47 = int_to_ptr.vmem [resolvable:$true] %s46
      %52 = dma.hbm_to_vmem [thread:$0]  %s3, 16384, %s47, [#allocation5], 256, 256, 16
    $region17: #{discriminator_forward.1} parent=1 // pred_fallthru
      _
    // Predicated region
    $region18: #{discriminator_forward.1} parent=1 // pred_check
      _
    $region19: #{discriminator_forward.1} parent=1 // pred_check_branch
      %54 = sbr.rel (0) target = $region21
    $region20: #{discriminator_forward.1} parent=1 // pred_region
      %s56 = ssub.s32 32, 32
      %57 = vsyncadd [#allocation8], %s56
      %s59 = sshll.u32 [#allocation7], 4
      %s60 = int_to_ptr.vmem [resolvable:$true] %s59
      %62 = dma.hbm_to_vmem [thread:$0]  %s4, 32, %s60, [#allocation8]
    $region21: #{discriminator_forward.1} parent=1 // pred_fallthru
      _
    // Predicated region
    $region22: #{discriminator_forward.1} parent=1 // pred_check
      _
    $region23: #{discriminator_forward.1} parent=1 // pred_check_branch
      %64 = sbr.rel (0) target = $region25
    $region24: #{discriminator_forward.1} parent=1 // pred_region
      %s66 = ssub.s32 4096, 4096
      %67 = vsyncadd [#allocation8], %s66
      %s68 = sshll.u32 [#allocation9], 4
      %s69 = int_to_ptr.vmem [resolvable:$true] %s68
      %74 = dma.hbm_to_vmem [thread:$0]  %s5, 4096, %s69, [#allocation8], 128, 128, 8
    $region25: #{discriminator_forward.1} parent=1 // pred_fallthru
      _
    // Predicated region
    $region26: #{discriminator_forward.1} parent=1 // pred_check
      _
    $region27: #{discriminator_forward.1} parent=1 // pred_check_branch
      %76 = sbr.rel (0) target = $region29
    $region28: #{discriminator_forward.1} parent=1 // pred_region
      %s78 = ssub.s32 16, 16
      %79 = vsyncadd [#allocation11], %s78
      %s81 = sshll.u32 [#allocation10], 4
      %s82 = int_to_ptr.vmem [resolvable:$true] %s81
      %84 = dma.hbm_to_vmem [thread:$0]  %s6, 16, %s82, [#allocation11]
    $region29: #{discriminator_forward.1} parent=1 // pred_fallthru
      _
    // Predicated region
    $region30: #{discriminator_forward.1} parent=1 // pred_check
      _
    $region31: #{discriminator_forward.1} parent=1 // pred_check_branch
      %86 = sbr.rel (0) target = $region33
    $region32: #{discriminator_forward.1} parent=1 // pred_region
      %s88 = ssub.s32 2048, 2048
      %89 = vsyncadd [#allocation11], %s88
      %s90 = sshll.u32 [#allocation12], 4
      %s91 = int_to_ptr.vmem [resolvable:$true] %s90
      %96 = dma.hbm_to_vmem [thread:$0]  %s7, 2048, %s91, [#allocation11], 128, 128, 8
    $region33: #{discriminator_forward.1} parent=1 // pred_fallthru
      _
    // Predicated region
    $region34: #{discriminator_forward.1} parent=1 // pred_check
      _
    $region35: #{discriminator_forward.1} parent=1 // pred_check_branch
      %98 = sbr.rel (0) target = $region37
    $region36: #{discriminator_forward.1} parent=1 // pred_region
      %99 = dma.done [#allocation3], 49152
    $region37: #{discriminator_forward.1} parent=1 // pred_fallthru
      _
    // Predicated region
    $region38: #{discriminator_forward.1} parent=1 // pred_check
      _
    $region39: #{discriminator_forward.1} parent=1 // pred_check_branch
      %101 = sbr.rel (0) target = $region41
    $region40: #{discriminator_forward.1} parent=1 // pred_region
      %102 = dma.done [#allocation5], 64
    $region41: #{discriminator_forward.1} parent=1 // pred_fallthru
      _
    // Predicated region
    $region42: #{discriminator_forward.1} parent=1 // pred_check
      _
    $region43: #{discriminator_forward.1} parent=1 // pred_check_branch
      %104 = sbr.rel (0) target = $region45
    $region44: #{discriminator_forward.1} parent=1 // pred_region
      %105 = dma.done [#allocation5], 16384
    $region45: #{discriminator_forward.1} parent=1 // pred_fallthru
      _
    // Predicated region
    $region46: #{discriminator_forward.1} parent=1 // pred_check
      _
    $region47: #{discriminator_forward.1} parent=1 // pred_check_branch
      %107 = sbr.rel (0) target = $region49
    $region48: #{discriminator_forward.1} parent=1 // pred_region
      %108 = dma.done [#allocation8], 32
    $region49: #{discriminator_forward.1} parent=1 // pred_fallthru
      _
    // Predicated region
    $region50: #{discriminator_forward.1} parent=1 // pred_check
      _
    $region51: #{discriminator_forward.1} parent=1 // pred_check_branch
      %110 = sbr.rel (0) target = $region53
    $region52: #{discriminator_forward.1} parent=1 // pred_region
      %111 = dma.done [#allocation8], 4096
    $region53: #{discriminator_forward.1} parent=1 // pred_fallthru
      _
    // Predicated region
    $region54: #{discriminator_forward.1} parent=1 // pred_check
      _
    $region55: #{discriminator_forward.1} parent=1 // pred_check_branch
      %113 = sbr.rel (0) target = $region57
    $region56: #{discriminator_forward.1} parent=1 // pred_region
      %114 = dma.done [#allocation11], 16
    $region57: #{discriminator_forward.1} parent=1 // pred_fallthru
      _
    // Predicated region
    $region58: #{discriminator_forward.1} parent=1 // pred_check
      _
    $region59: #{discriminator_forward.1} parent=1 // pred_check_branch
      %116 = sbr.rel (0) target = $region61
    $region60: #{discriminator_forward.1} parent=1 // pred_region
      %117 = dma.done [#allocation11], 2048
    $region61: #{discriminator_forward.1} parent=1 // pred_fallthru
      _
    %v118 = vld [vmem:[%s0] sm:$0xff]
    %v119 = vld [vmem:[%s0 + $0x8] sm:$0xf]
    %v120 = vld [vmem:[#allocation2] sm:$0xff]
    %v121 = vld [vmem:[#allocation2 + $0x8] sm:$0xff]
    %v122 = vld [vmem:[#allocation2 + $0x10] sm:$0xff]
    %v123 = vld [vmem:[#allocation2 + $0x18] sm:$0xff]
    %v124 = vld [vmem:[#allocation2 + $0x20] sm:$0xff]
    %v125 = vld [vmem:[#allocation2 + $0x28] sm:$0xff]
    %v126 = vld [vmem:[#allocation2 + $0x30] sm:$0xff]
    %v127 = vld [vmem:[#allocation2 + $0x38] sm:$0xff]
    %v128 = vld [vmem:[#allocation2 + $0x40] sm:$0xff]
    %v129 = vld [vmem:[#allocation2 + $0x48] sm:$0xff]
    %v130 = vld [vmem:[#allocation2 + $0x50] sm:$0xff]
    %v131 = vld [vmem:[#allocation2 + $0x58] sm:$0xff]
    %v132 = vld [vmem:[#allocation2 + $0x60] sm:$0xff]
    %v133 = vld [vmem:[#allocation2 + $0x68] sm:$0xff]
    %v134 = vld [vmem:[#allocation2 + $0x70] sm:$0xff]
    %v135 = vld [vmem:[#allocation2 + $0x78] sm:$0xff]
    %v136 = vld [vmem:[#allocation2 + $0x80] sm:$0xff]
    %v137 = vld [vmem:[#allocation2 + $0x88] sm:$0xff]
    %v138 = vld [vmem:[#allocation2 + $0x90] sm:$0xff]
    %v139 = vld [vmem:[#allocation2 + $0x98] sm:$0xff]
    %v140 = vld [vmem:[#allocation2 + $0xa0] sm:$0xff]
    %v141 = vld [vmem:[#allocation2 + $0xa8] sm:$0xff]
    %v142 = vld [vmem:[#allocation2 + $0xb0] sm:$0xff]
    %v143 = vld [vmem:[#allocation2 + $0xb8] sm:$0xff]
    %v144 = vld [vmem:[#allocation2 + $0xc0] sm:$0xff]
    %v145 = vld [vmem:[#allocation2 + $0xc8] sm:$0xff]
    %v146 = vld [vmem:[#allocation2 + $0xd0] sm:$0xff]
    %v147 = vld [vmem:[#allocation2 + $0xd8] sm:$0xff]
    %v148 = vld [vmem:[#allocation2 + $0xe0] sm:$0xff]
    %v149 = vld [vmem:[#allocation2 + $0xe8] sm:$0xff]
    %v150 = vld [vmem:[#allocation2 + $0xf0] sm:$0xff]
    %v151 = vld [vmem:[#allocation2 + $0xf8] sm:$0xff]
    %v152 = vld [vmem:[#allocation2 + $0x100] sm:$0xff]
    %v153 = vld [vmem:[#allocation2 + $0x108] sm:$0xff]
    %v154 = vld [vmem:[#allocation2 + $0x110] sm:$0xff]
    %v155 = vld [vmem:[#allocation2 + $0x118] sm:$0xff]
    %v156 = vld [vmem:[#allocation2 + $0x120] sm:$0xff]
    %v157 = vld [vmem:[#allocation2 + $0x128] sm:$0xff]
    %v158 = vld [vmem:[#allocation2 + $0x130] sm:$0xff]
    %v159 = vld [vmem:[#allocation2 + $0x138] sm:$0xff]
    %v160 = vld [vmem:[#allocation2 + $0x140] sm:$0xff]
    %v161 = vld [vmem:[#allocation2 + $0x148] sm:$0xff]
    %v162 = vld [vmem:[#allocation2 + $0x150] sm:$0xff]
    %v163 = vld [vmem:[#allocation2 + $0x158] sm:$0xff]
    %v164 = vld [vmem:[#allocation2 + $0x160] sm:$0xff]
    %v165 = vld [vmem:[#allocation2 + $0x168] sm:$0xff]
    %v166 = vld [vmem:[#allocation2 + $0x170] sm:$0xff]
    %v167 = vld [vmem:[#allocation2 + $0x178] sm:$0xff]
    %v168 = vld [vmem:[#allocation2 + $0x180] sm:$0xff]
    %v169 = vld [vmem:[#allocation2 + $0x188] sm:$0xff]
    %v170 = vld [vmem:[#allocation2 + $0x190] sm:$0xff]
    %v171 = vld [vmem:[#allocation2 + $0x198] sm:$0xff]
    %v172 = vld [vmem:[#allocation2 + $0x1a0] sm:$0xff]
    %v173 = vld [vmem:[#allocation2 + $0x1a8] sm:$0xff]
    %v174 = vld [vmem:[#allocation2 + $0x1b0] sm:$0xff]
    %v175 = vld [vmem:[#allocation2 + $0x1b8] sm:$0xff]
    %v176 = vld [vmem:[#allocation2 + $0x1c0] sm:$0xff]
    %v177 = vld [vmem:[#allocation2 + $0x1c8] sm:$0xff]
    %v178 = vld [vmem:[#allocation2 + $0x1d0] sm:$0xff]
    %v179 = vld [vmem:[#allocation2 + $0x1d8] sm:$0xff]
    %v180 = vld [vmem:[#allocation2 + $0x1e0] sm:$0xff]
    %v181 = vld [vmem:[#allocation2 + $0x1e8] sm:$0xff]
    %v182 = vld [vmem:[#allocation2 + $0x1f0] sm:$0xff]
    %v183 = vld [vmem:[#allocation2 + $0x1f8] sm:$0xff]
    %v184 = vld [vmem:[#allocation2 + $0x200] sm:$0xff]
    %v185 = vld [vmem:[#allocation2 + $0x208] sm:$0xff]
    %v186 = vld [vmem:[#allocation2 + $0x210] sm:$0xff]
    %v187 = vld [vmem:[#allocation2 + $0x218] sm:$0xff]
    %v188 = vld [vmem:[#allocation2 + $0x220] sm:$0xff]
    %v189 = vld [vmem:[#allocation2 + $0x228] sm:$0xff]
    %v190 = vld [vmem:[#allocation2 + $0x230] sm:$0xff]
    %v191 = vld [vmem:[#allocation2 + $0x238] sm:$0xff]
    %v192 = vld [vmem:[#allocation2 + $0x240] sm:$0xff]
    %v193 = vld [vmem:[#allocation2 + $0x248] sm:$0xff]
    %v194 = vld [vmem:[#allocation2 + $0x250] sm:$0xff]
    %v195 = vld [vmem:[#allocation2 + $0x258] sm:$0xff]
    %v196 = vld [vmem:[#allocation2 + $0x260] sm:$0xff]
    %v197 = vld [vmem:[#allocation2 + $0x268] sm:$0xff]
    %v198 = vld [vmem:[#allocation2 + $0x270] sm:$0xff]
    %v199 = vld [vmem:[#allocation2 + $0x278] sm:$0xff]
    %v200 = vld [vmem:[#allocation2 + $0x280] sm:$0xff]
    %v201 = vld [vmem:[#allocation2 + $0x288] sm:$0xff]
    %v202 = vld [vmem:[#allocation2 + $0x290] sm:$0xff]
    %v203 = vld [vmem:[#allocation2 + $0x298] sm:$0xff]
    %v204 = vld [vmem:[#allocation2 + $0x2a0] sm:$0xff]
    %v205 = vld [vmem:[#allocation2 + $0x2a8] sm:$0xff]
    %v206 = vld [vmem:[#allocation2 + $0x2b0] sm:$0xff]
    %v207 = vld [vmem:[#allocation2 + $0x2b8] sm:$0xff]
    %v208 = vld [vmem:[#allocation2 + $0x2c0] sm:$0xff]
    %v209 = vld [vmem:[#allocation2 + $0x2c8] sm:$0xff]
    %v210 = vld [vmem:[#allocation2 + $0x2d0] sm:$0xff]
    %v211 = vld [vmem:[#allocation2 + $0x2d8] sm:$0xff]
    %v212 = vld [vmem:[#allocation2 + $0x2e0] sm:$0xff]
    %v213 = vld [vmem:[#allocation2 + $0x2e8] sm:$0xff]
    %v214 = vld [vmem:[#allocation2 + $0x2f0] sm:$0xff]
    %v215 = vld [vmem:[#allocation2 + $0x2f8] sm:$0xff]
    %v216 = vld [vmem:[#allocation2 + $0x300] sm:$0xff]
    %v217 = vld [vmem:[#allocation2 + $0x308] sm:$0xff]
    %v218 = vld [vmem:[#allocation2 + $0x310] sm:$0xff]
    %v219 = vld [vmem:[#allocation2 + $0x318] sm:$0xff]
    %v220 = vld [vmem:[#allocation2 + $0x320] sm:$0xff]
    %v221 = vld [vmem:[#allocation2 + $0x328] sm:$0xff]
    %v222 = vld [vmem:[#allocation2 + $0x330] sm:$0xff]
    %v223 = vld [vmem:[#allocation2 + $0x338] sm:$0xff]
    %v224 = vld [vmem:[#allocation2 + $0x340] sm:$0xff]
    %v225 = vld [vmem:[#allocation2 + $0x348] sm:$0xff]
    %v226 = vld [vmem:[#allocation2 + $0x350] sm:$0xff]
    %v227 = vld [vmem:[#allocation2 + $0x358] sm:$0xff]
    %v228 = vld [vmem:[#allocation2 + $0x360] sm:$0xff]
    %v229 = vld [vmem:[#allocation2 + $0x368] sm:$0xff]
    %v230 = vld [vmem:[#allocation2 + $0x370] sm:$0xff]
    %v231 = vld [vmem:[#allocation2 + $0x378] sm:$0xff]
    %v232 = vld [vmem:[#allocation2 + $0x380] sm:$0xff]
    %v233 = vld [vmem:[#allocation2 + $0x388] sm:$0xff]
    %v234 = vld [vmem:[#allocation2 + $0x390] sm:$0xff]
    %v235 = vld [vmem:[#allocation2 + $0x398] sm:$0xff]
    %v236 = vld [vmem:[#allocation2 + $0x3a0] sm:$0xff]
    %v237 = vld [vmem:[#allocation2 + $0x3a8] sm:$0xff]
    %v238 = vld [vmem:[#allocation2 + $0x3b0] sm:$0xff]
    %v239 = vld [vmem:[#allocation2 + $0x3b8] sm:$0xff]
    %v240 = vld [vmem:[#allocation2 + $0x3c0] sm:$0xff]
    %v241 = vld [vmem:[#allocation2 + $0x3c8] sm:$0xff]
    %v242 = vld [vmem:[#allocation2 + $0x3d0] sm:$0xff]
    %v243 = vld [vmem:[#allocation2 + $0x3d8] sm:$0xff]
    %v244 = vld [vmem:[#allocation2 + $0x3e0] sm:$0xff]
    %v245 = vld [vmem:[#allocation2 + $0x3e8] sm:$0xff]
    %v246 = vld [vmem:[#allocation2 + $0x3f0] sm:$0xff]
    %v247 = vld [vmem:[#allocation2 + $0x3f8] sm:$0xff]
    %v248 = vld [vmem:[#allocation2 + $0x400] sm:$0xff]
    %v249 = vld [vmem:[#allocation2 + $0x408] sm:$0xff]
    %v250 = vld [vmem:[#allocation2 + $0x410] sm:$0xff]
    %v251 = vld [vmem:[#allocation2 + $0x418] sm:$0xff]
    %v252 = vld [vmem:[#allocation2 + $0x420] sm:$0xff]
    %v253 = vld [vmem:[#allocation2 + $0x428] sm:$0xff]
    %v254 = vld [vmem:[#allocation2 + $0x430] sm:$0xff]
    %v255 = vld [vmem:[#allocation2 + $0x438] sm:$0xff]
    %v256 = vld [vmem:[#allocation2 + $0x440] sm:$0xff]
    %v257 = vld [vmem:[#allocation2 + $0x448] sm:$0xff]
    %v258 = vld [vmem:[#allocation2 + $0x450] sm:$0xff]
    %v259 = vld [vmem:[#allocation2 + $0x458] sm:$0xff]
    %v260 = vld [vmem:[#allocation2 + $0x460] sm:$0xff]
    %v261 = vld [vmem:[#allocation2 + $0x468] sm:$0xff]
    %v262 = vld [vmem:[#allocation2 + $0x470] sm:$0xff]
    %v263 = vld [vmem:[#allocation2 + $0x478] sm:$0xff]
    %v264 = vld [vmem:[#allocation2 + $0x480] sm:$0xff]
    %v265 = vld [vmem:[#allocation2 + $0x488] sm:$0xff]
    %v266 = vld [vmem:[#allocation2 + $0x490] sm:$0xff]
    %v267 = vld [vmem:[#allocation2 + $0x498] sm:$0xff]
    %v268 = vld [vmem:[#allocation2 + $0x4a0] sm:$0xff]
    %v269 = vld [vmem:[#allocation2 + $0x4a8] sm:$0xff]
    %v270 = vld [vmem:[#allocation2 + $0x4b0] sm:$0xff]
    %v271 = vld [vmem:[#allocation2 + $0x4b8] sm:$0xff]
    %v272 = vld [vmem:[#allocation2 + $0x4c0] sm:$0xff]
    %v273 = vld [vmem:[#allocation2 + $0x4c8] sm:$0xff]
    %v274 = vld [vmem:[#allocation2 + $0x4d0] sm:$0xff]
    %v275 = vld [vmem:[#allocation2 + $0x4d8] sm:$0xff]
    %v276 = vld [vmem:[#allocation2 + $0x4e0] sm:$0xff]
    %v277 = vld [vmem:[#allocation2 + $0x4e8] sm:$0xff]
    %v278 = vld [vmem:[#allocation2 + $0x4f0] sm:$0xff]
    %v279 = vld [vmem:[#allocation2 + $0x4f8] sm:$0xff]
    %v280 = vld [vmem:[#allocation2 + $0x500] sm:$0xff]
    %v281 = vld [vmem:[#allocation2 + $0x508] sm:$0xff]
    %v282 = vld [vmem:[#allocation2 + $0x510] sm:$0xff]
    %v283 = vld [vmem:[#allocation2 + $0x518] sm:$0xff]
    %v284 = vld [vmem:[#allocation2 + $0x520] sm:$0xff]
    %v285 = vld [vmem:[#allocation2 + $0x528] sm:$0xff]
    %v286 = vld [vmem:[#allocation2 + $0x530] sm:$0xff]
    %v287 = vld [vmem:[#allocation2 + $0x538] sm:$0xff]
    %v288 = vld [vmem:[#allocation2 + $0x540] sm:$0xff]
    %v289 = vld [vmem:[#allocation2 + $0x548] sm:$0xff]
    %v290 = vld [vmem:[#allocation2 + $0x550] sm:$0xff]
    %v291 = vld [vmem:[#allocation2 + $0x558] sm:$0xff]
    %v292 = vld [vmem:[#allocation2 + $0x560] sm:$0xff]
    %v293 = vld [vmem:[#allocation2 + $0x568] sm:$0xff]
    %v294 = vld [vmem:[#allocation2 + $0x570] sm:$0xff]
    %v295 = vld [vmem:[#allocation2 + $0x578] sm:$0xff]
    %v296 = vld [vmem:[#allocation2 + $0x580] sm:$0xff]
    %v297 = vld [vmem:[#allocation2 + $0x588] sm:$0xff]
    %v298 = vld [vmem:[#allocation2 + $0x590] sm:$0xff]
    %v299 = vld [vmem:[#allocation2 + $0x598] sm:$0xff]
    %v300 = vld [vmem:[#allocation2 + $0x5a0] sm:$0xff]
    %v301 = vld [vmem:[#allocation2 + $0x5a8] sm:$0xff]
    %v302 = vld [vmem:[#allocation2 + $0x5b0] sm:$0xff]
    %v303 = vld [vmem:[#allocation2 + $0x5b8] sm:$0xff]
    %v304 = vld [vmem:[#allocation2 + $0x5c0] sm:$0xff]
    %v305 = vld [vmem:[#allocation2 + $0x5c8] sm:$0xff]
    %v306 = vld [vmem:[#allocation2 + $0x5d0] sm:$0xff]
    %v307 = vld [vmem:[#allocation2 + $0x5d8] sm:$0xff]
    %v308 = vld [vmem:[#allocation2 + $0x5e0] sm:$0xff]
    %v309 = vld [vmem:[#allocation2 + $0x5e8] sm:$0xff]
    %v310 = vld [vmem:[#allocation2 + $0x5f0] sm:$0xff]
    %v311 = vld [vmem:[#allocation2 + $0x5f8] sm:$0xff]
    %v312 = vld [vmem:[#allocation2 + $0x600] sm:$0xff]
    %v313 = vld [vmem:[#allocation2 + $0x608] sm:$0xff]
    %v314 = vld [vmem:[#allocation2 + $0x610] sm:$0xff]
    %v315 = vld [vmem:[#allocation2 + $0x618] sm:$0xff]
    %v316 = vld [vmem:[#allocation2 + $0x620] sm:$0xff]
    %v317 = vld [vmem:[#allocation2 + $0x628] sm:$0xff]
    %v318 = vld [vmem:[#allocation2 + $0x630] sm:$0xff]
    %v319 = vld [vmem:[#allocation2 + $0x638] sm:$0xff]
    %v320 = vld [vmem:[#allocation2 + $0x640] sm:$0xff]
    %v321 = vld [vmem:[#allocation2 + $0x648] sm:$0xff]
    %v322 = vld [vmem:[#allocation2 + $0x650] sm:$0xff]
    %v323 = vld [vmem:[#allocation2 + $0x658] sm:$0xff]
    %v324 = vld [vmem:[#allocation2 + $0x660] sm:$0xff]
    %v325 = vld [vmem:[#allocation2 + $0x668] sm:$0xff]
    %v326 = vld [vmem:[#allocation2 + $0x670] sm:$0xff]
    %v327 = vld [vmem:[#allocation2 + $0x678] sm:$0xff]
    %v328 = vld [vmem:[#allocation2 + $0x680] sm:$0xff]
    %v329 = vld [vmem:[#allocation2 + $0x688] sm:$0xff]
    %v330 = vld [vmem:[#allocation2 + $0x690] sm:$0xff]
    %v331 = vld [vmem:[#allocation2 + $0x698] sm:$0xff]
    %v332 = vld [vmem:[#allocation2 + $0x6a0] sm:$0xff]
    %v333 = vld [vmem:[#allocation2 + $0x6a8] sm:$0xff]
    %v334 = vld [vmem:[#allocation2 + $0x6b0] sm:$0xff]
    %v335 = vld [vmem:[#allocation2 + $0x6b8] sm:$0xff]
    %v336 = vld [vmem:[#allocation2 + $0x6c0] sm:$0xff]
    %v337 = vld [vmem:[#allocation2 + $0x6c8] sm:$0xff]
    %v338 = vld [vmem:[#allocation2 + $0x6d0] sm:$0xff]
    %v339 = vld [vmem:[#allocation2 + $0x6d8] sm:$0xff]
    %v340 = vld [vmem:[#allocation2 + $0x6e0] sm:$0xff]
    %v341 = vld [vmem:[#allocation2 + $0x6e8] sm:$0xff]
    %v342 = vld [vmem:[#allocation2 + $0x6f0] sm:$0xff]
    %v343 = vld [vmem:[#allocation2 + $0x6f8] sm:$0xff]
    %v344 = vld [vmem:[#allocation2 + $0x700] sm:$0xff]
    %v345 = vld [vmem:[#allocation2 + $0x708] sm:$0xff]
    %v346 = vld [vmem:[#allocation2 + $0x710] sm:$0xff]
    %v347 = vld [vmem:[#allocation2 + $0x718] sm:$0xff]
    %v348 = vld [vmem:[#allocation2 + $0x720] sm:$0xff]
    %v349 = vld [vmem:[#allocation2 + $0x728] sm:$0xff]
    %v350 = vld [vmem:[#allocation2 + $0x730] sm:$0xff]
    %v351 = vld [vmem:[#allocation2 + $0x738] sm:$0xff]
    %v352 = vld [vmem:[#allocation2 + $0x740] sm:$0xff]
    %v353 = vld [vmem:[#allocation2 + $0x748] sm:$0xff]
    %v354 = vld [vmem:[#allocation2 + $0x750] sm:$0xff]
    %v355 = vld [vmem:[#allocation2 + $0x758] sm:$0xff]
    %v356 = vld [vmem:[#allocation2 + $0x760] sm:$0xff]
    %v357 = vld [vmem:[#allocation2 + $0x768] sm:$0xff]
    %v358 = vld [vmem:[#allocation2 + $0x770] sm:$0xff]
    %v359 = vld [vmem:[#allocation2 + $0x778] sm:$0xff]
    %v360 = vld [vmem:[#allocation2 + $0x780] sm:$0xff]
    %v361 = vld [vmem:[#allocation2 + $0x788] sm:$0xff]
    %v362 = vld [vmem:[#allocation2 + $0x790] sm:$0xff]
    %v363 = vld [vmem:[#allocation2 + $0x798] sm:$0xff]
    %v364 = vld [vmem:[#allocation2 + $0x7a0] sm:$0xff]
    %v365 = vld [vmem:[#allocation2 + $0x7a8] sm:$0xff]
    %v366 = vld [vmem:[#allocation2 + $0x7b0] sm:$0xff]
    %v367 = vld [vmem:[#allocation2 + $0x7b8] sm:$0xff]
    %v368 = vld [vmem:[#allocation2 + $0x7c0] sm:$0xff]
    %v369 = vld [vmem:[#allocation2 + $0x7c8] sm:$0xff]
    %v370 = vld [vmem:[#allocation2 + $0x7d0] sm:$0xff]
    %v371 = vld [vmem:[#allocation2 + $0x7d8] sm:$0xff]
    %v372 = vld [vmem:[#allocation2 + $0x7e0] sm:$0xff]
    %v373 = vld [vmem:[#allocation2 + $0x7e8] sm:$0xff]
    %v374 = vld [vmem:[#allocation2 + $0x7f0] sm:$0xff]
    %v375 = vld [vmem:[#allocation2 + $0x7f8] sm:$0xff]
    %v376 = vld [vmem:[#allocation2 + $0x800] sm:$0xff]
    %v377 = vld [vmem:[#allocation2 + $0x808] sm:$0xff]
    %v378 = vld [vmem:[#allocation2 + $0x810] sm:$0xff]
    %v379 = vld [vmem:[#allocation2 + $0x818] sm:$0xff]
    %v380 = vld [vmem:[#allocation2 + $0x820] sm:$0xff]
    %v381 = vld [vmem:[#allocation2 + $0x828] sm:$0xff]
    %v382 = vld [vmem:[#allocation2 + $0x830] sm:$0xff]
    %v383 = vld [vmem:[#allocation2 + $0x838] sm:$0xff]
    %v384 = vld [vmem:[#allocation2 + $0x840] sm:$0xff]
    %v385 = vld [vmem:[#allocation2 + $0x848] sm:$0xff]
    %v386 = vld [vmem:[#allocation2 + $0x850] sm:$0xff]
    %v387 = vld [vmem:[#allocation2 + $0x858] sm:$0xff]
    %v388 = vld [vmem:[#allocation2 + $0x860] sm:$0xff]
    %v389 = vld [vmem:[#allocation2 + $0x868] sm:$0xff]
    %v390 = vld [vmem:[#allocation2 + $0x870] sm:$0xff]
    %v391 = vld [vmem:[#allocation2 + $0x878] sm:$0xff]
    %v392 = vld [vmem:[#allocation2 + $0x880] sm:$0xff]
    %v393 = vld [vmem:[#allocation2 + $0x888] sm:$0xff]
    %v394 = vld [vmem:[#allocation2 + $0x890] sm:$0xff]
    %v395 = vld [vmem:[#allocation2 + $0x898] sm:$0xff]
    %v396 = vld [vmem:[#allocation2 + $0x8a0] sm:$0xff]
    %v397 = vld [vmem:[#allocation2 + $0x8a8] sm:$0xff]
    %v398 = vld [vmem:[#allocation2 + $0x8b0] sm:$0xff]
    %v399 = vld [vmem:[#allocation2 + $0x8b8] sm:$0xff]
    %v400 = vld [vmem:[#allocation2 + $0x8c0] sm:$0xff]
    %v401 = vld [vmem:[#allocation2 + $0x8c8] sm:$0xff]
    %v402 = vld [vmem:[#allocation2 + $0x8d0] sm:$0xff]
    %v403 = vld [vmem:[#allocation2 + $0x8d8] sm:$0xff]
    %v404 = vld [vmem:[#allocation2 + $0x8e0] sm:$0xff]
    %v405 = vld [vmem:[#allocation2 + $0x8e8] sm:$0xff]
    %v406 = vld [vmem:[#allocation2 + $0x8f0] sm:$0xff]
    %v407 = vld [vmem:[#allocation2 + $0x8f8] sm:$0xff]
    %v408 = vld [vmem:[#allocation2 + $0x900] sm:$0xff]
    %v409 = vld [vmem:[#allocation2 + $0x908] sm:$0xff]
    %v410 = vld [vmem:[#allocation2 + $0x910] sm:$0xff]
    %v411 = vld [vmem:[#allocation2 + $0x918] sm:$0xff]
    %v412 = vld [vmem:[#allocation2 + $0x920] sm:$0xff]
    %v413 = vld [vmem:[#allocation2 + $0x928] sm:$0xff]
    %v414 = vld [vmem:[#allocation2 + $0x930] sm:$0xff]
    %v415 = vld [vmem:[#allocation2 + $0x938] sm:$0xff]
    %v416 = vld [vmem:[#allocation2 + $0x940] sm:$0xff]
    %v417 = vld [vmem:[#allocation2 + $0x948] sm:$0xff]
    %v418 = vld [vmem:[#allocation2 + $0x950] sm:$0xff]
    %v419 = vld [vmem:[#allocation2 + $0x958] sm:$0xff]
    %v420 = vld [vmem:[#allocation2 + $0x960] sm:$0xff]
    %v421 = vld [vmem:[#allocation2 + $0x968] sm:$0xff]
    %v422 = vld [vmem:[#allocation2 + $0x970] sm:$0xff]
    %v423 = vld [vmem:[#allocation2 + $0x978] sm:$0xff]
    %v424 = vld [vmem:[#allocation2 + $0x980] sm:$0xff]
    %v425 = vld [vmem:[#allocation2 + $0x988] sm:$0xff]
    %v426 = vld [vmem:[#allocation2 + $0x990] sm:$0xff]
    %v427 = vld [vmem:[#allocation2 + $0x998] sm:$0xff]
    %v428 = vld [vmem:[#allocation2 + $0x9a0] sm:$0xff]
    %v429 = vld [vmem:[#allocation2 + $0x9a8] sm:$0xff]
    %v430 = vld [vmem:[#allocation2 + $0x9b0] sm:$0xff]
    %v431 = vld [vmem:[#allocation2 + $0x9b8] sm:$0xff]
    %v432 = vld [vmem:[#allocation2 + $0x9c0] sm:$0xff]
    %v433 = vld [vmem:[#allocation2 + $0x9c8] sm:$0xff]
    %v434 = vld [vmem:[#allocation2 + $0x9d0] sm:$0xff]
    %v435 = vld [vmem:[#allocation2 + $0x9d8] sm:$0xff]
    %v436 = vld [vmem:[#allocation2 + $0x9e0] sm:$0xff]
    %v437 = vld [vmem:[#allocation2 + $0x9e8] sm:$0xff]
    %v438 = vld [vmem:[#allocation2 + $0x9f0] sm:$0xff]
    %v439 = vld [vmem:[#allocation2 + $0x9f8] sm:$0xff]
    %v440 = vld [vmem:[#allocation2 + $0xa00] sm:$0xff]
    %v441 = vld [vmem:[#allocation2 + $0xa08] sm:$0xff]
    %v442 = vld [vmem:[#allocation2 + $0xa10] sm:$0xff]
    %v443 = vld [vmem:[#allocation2 + $0xa18] sm:$0xff]
    %v444 = vld [vmem:[#allocation2 + $0xa20] sm:$0xff]
    %v445 = vld [vmem:[#allocation2 + $0xa28] sm:$0xff]
    %v446 = vld [vmem:[#allocation2 + $0xa30] sm:$0xff]
    %v447 = vld [vmem:[#allocation2 + $0xa38] sm:$0xff]
    %v448 = vld [vmem:[#allocation2 + $0xa40] sm:$0xff]
    %v449 = vld [vmem:[#allocation2 + $0xa48] sm:$0xff]
    %v450 = vld [vmem:[#allocation2 + $0xa50] sm:$0xff]
    %v451 = vld [vmem:[#allocation2 + $0xa58] sm:$0xff]
    %v452 = vld [vmem:[#allocation2 + $0xa60] sm:$0xff]
    %v453 = vld [vmem:[#allocation2 + $0xa68] sm:$0xff]
    %v454 = vld [vmem:[#allocation2 + $0xa70] sm:$0xff]
    %v455 = vld [vmem:[#allocation2 + $0xa78] sm:$0xff]
    %v456 = vld [vmem:[#allocation2 + $0xa80] sm:$0xff]
    %v457 = vld [vmem:[#allocation2 + $0xa88] sm:$0xff]
    %v458 = vld [vmem:[#allocation2 + $0xa90] sm:$0xff]
    %v459 = vld [vmem:[#allocation2 + $0xa98] sm:$0xff]
    %v460 = vld [vmem:[#allocation2 + $0xaa0] sm:$0xff]
    %v461 = vld [vmem:[#allocation2 + $0xaa8] sm:$0xff]
    %v462 = vld [vmem:[#allocation2 + $0xab0] sm:$0xff]
    %v463 = vld [vmem:[#allocation2 + $0xab8] sm:$0xff]
    %v464 = vld [vmem:[#allocation2 + $0xac0] sm:$0xff]
    %v465 = vld [vmem:[#allocation2 + $0xac8] sm:$0xff]
    %v466 = vld [vmem:[#allocation2 + $0xad0] sm:$0xff]
    %v467 = vld [vmem:[#allocation2 + $0xad8] sm:$0xff]
    %v468 = vld [vmem:[#allocation2 + $0xae0] sm:$0xff]
    %v469 = vld [vmem:[#allocation2 + $0xae8] sm:$0xff]
    %v470 = vld [vmem:[#allocation2 + $0xaf0] sm:$0xff]
    %v471 = vld [vmem:[#allocation2 + $0xaf8] sm:$0xff]
    %v472 = vld [vmem:[#allocation2 + $0xb00] sm:$0xff]
    %v473 = vld [vmem:[#allocation2 + $0xb08] sm:$0xff]
    %v474 = vld [vmem:[#allocation2 + $0xb10] sm:$0xff]
    %v475 = vld [vmem:[#allocation2 + $0xb18] sm:$0xff]
    %v476 = vld [vmem:[#allocation2 + $0xb20] sm:$0xff]
    %v477 = vld [vmem:[#allocation2 + $0xb28] sm:$0xff]
    %v478 = vld [vmem:[#allocation2 + $0xb30] sm:$0xff]
    %v479 = vld [vmem:[#allocation2 + $0xb38] sm:$0xff]
    %v480 = vld [vmem:[#allocation2 + $0xb40] sm:$0xff]
    %v481 = vld [vmem:[#allocation2 + $0xb48] sm:$0xff]
    %v482 = vld [vmem:[#allocation2 + $0xb50] sm:$0xff]
    %v483 = vld [vmem:[#allocation2 + $0xb58] sm:$0xff]
    %v484 = vld [vmem:[#allocation2 + $0xb60] sm:$0xff]
    %v485 = vld [vmem:[#allocation2 + $0xb68] sm:$0xff]
    %v486 = vld [vmem:[#allocation2 + $0xb70] sm:$0xff]
    %v487 = vld [vmem:[#allocation2 + $0xb78] sm:$0xff]
    %v488 = vld [vmem:[#allocation2 + $0xb80] sm:$0xff]
    %v489 = vld [vmem:[#allocation2 + $0xb88] sm:$0xff]
    %v490 = vld [vmem:[#allocation2 + $0xb90] sm:$0xff]
    %v491 = vld [vmem:[#allocation2 + $0xb98] sm:$0xff]
    %v492 = vld [vmem:[#allocation2 + $0xba0] sm:$0xff]
    %v493 = vld [vmem:[#allocation2 + $0xba8] sm:$0xff]
    %v494 = vld [vmem:[#allocation2 + $0xbb0] sm:$0xff]
    %v495 = vld [vmem:[#allocation2 + $0xbb8] sm:$0xff]
    %v496 = vld [vmem:[#allocation2 + $0xbc0] sm:$0xff]
    %v497 = vld [vmem:[#allocation2 + $0xbc8] sm:$0xff]
    %v498 = vld [vmem:[#allocation2 + $0xbd0] sm:$0xff]
    %v499 = vld [vmem:[#allocation2 + $0xbd8] sm:$0xff]
    %v500 = vld [vmem:[#allocation2 + $0xbe0] sm:$0xff]
    %v501 = vld [vmem:[#allocation2 + $0xbe8] sm:$0xff]
    %v502 = vld [vmem:[#allocation2 + $0xbf0] sm:$0xff]
    %v503 = vld [vmem:[#allocation2 + $0xbf8] sm:$0xff]
    %v504 = vld [vmem:[#allocation4] sm:$0xf]
    %v506 = vlaneseq
    %v507 = vshrl.u32 %v506, 7
    %v508 = vsub.s32 0, %v507
    %v509 = vrot.slane %v504, %v508
    %v510 = vlaneseq
    %v511 = vshrl.u32 %v510, 7
    %v512 = vsub.s32 1, %v511
    %v513 = vrot.slane %v504, %v512
    %v514 = vlaneseq
    %v515 = vshrl.u32 %v514, 7
    %v516 = vsub.s32 2, %v515
    %v517 = vrot.slane %v504, %v516
    %v518 = vlaneseq
    %v519 = vshrl.u32 %v518, 7
    %v520 = vsub.s32 3, %v519
    %v521 = vrot.slane %v504, %v520
    %v528 = vcombine.high %v118, %v118
    %v530 = vunpack.c.l.s4 1983009808
    %v531 = vunpack.c.0.s8 %v530
    %v532 = vlaneseq
    %v533 = vshrl.u32 %v532, 7
    %v534 = vsub.s32 %v531, %v533
    %v535 = vrot.slane %v118, %v534
    %v537 = vunpack.c.l.s4 1983009808
    %v538 = vunpack.c.0.s8 %v537
    %v539 = vlaneseq
    %v540 = vshrl.u32 %v539, 7
    %v541 = vsub.s32 %v538, %v540
    %v542 = vrot.slane %v528, %v541
    %v543 = vcombine.high %v535, %v535
    %v544 = vcombine.high %v542, %v542
    %v546 = vunpack.c.l.s4 1983009808
    %v547 = vunpack.c.0.s8 %v546
    %v548 = vlaneseq
    %v549 = vshrl.u32 %v548, 7
    %v550 = vsub.s32 %v547, %v549
    %v551 = vrot.slane %v119, %v550
    %v552 = vcombine.high %v551, %v551
    %559 = vmatprep.subr.mxu0 %v121
    %560 = vmatpush1.msra.mxu0 %v120
    %561 = vmatprep.subr.mxu0 %v125
    %562 = vmatpush1.msra.mxu0 %v124
    %563 = vmatprep.subr.mxu0 %v129
    %564 = vmatpush1.msra.mxu0 %v128
    %565 = vmatprep.subr.mxu0 %v133
    %566 = vmatpush1.msra.mxu0 %v132
    %567 = vmatprep.subr.mxu0 %v137
    %568 = vmatpush1.msra.mxu0 %v136
    %569 = vmatprep.subr.mxu0 %v141
    %570 = vmatpush1.msra.mxu0 %v140
    %571 = vmatprep.subr.mxu0 %v145
    %572 = vmatpush1.msra.mxu0 %v144
    %573 = vmatprep.subr.mxu0 %v149
    %574 = vmatpush1.msra.mxu0 %v148
    %575 = vmatprep.subr.mxu0 %v153
    %576 = vmatpush1.msra.mxu0 %v152
    %577 = vmatprep.subr.mxu0 %v157
    %578 = vmatpush1.msra.mxu0 %v156
    %579 = vmatprep.subr.mxu0 %v161
    %580 = vmatpush1.msra.mxu0 %v160
    %581 = vmatprep.subr.mxu0 %v165
    %582 = vmatpush1.msra.mxu0 %v164
    %583 = vmatprep.subr.mxu0 %v169
    %584 = vmatpush1.msra.mxu0 %v168
    %585 = vmatprep.subr.mxu0 %v173
    %586 = vmatpush1.msra.mxu0 %v172
    %587 = vmatprep.subr.mxu0 %v177
    %588 = vmatpush1.msra.mxu0 %v176
    %589 = vmatprep.subr.mxu0 %v181
    %590 = vmatpush1.msra.mxu0 %v180
    %591 = vmatprep.subr.mxu0 %v185
    %592 = vmatpush1.msra.mxu0 %v184
    %593 = vmatprep.subr.mxu0 %v189
    %594 = vmatpush1.msra.mxu0 %v188
    %595 = vmatprep.subr.mxu0 %v193
    %596 = vmatpush1.msra.mxu0 %v192
    %597 = vmatprep.subr.mxu0 %v197
    %598 = vmatpush1.msra.mxu0 %v196
    %599 = vmatprep.subr.mxu0 %v201
    %600 = vmatpush1.msra.mxu0 %v200
    %601 = vmatprep.subr.mxu0 %v205
    %602 = vmatpush1.msra.mxu0 %v204
    %603 = vmatprep.subr.mxu0 %v209
    %604 = vmatpush1.msra.mxu0 %v208
    %605 = vmatprep.subr.mxu0 %v213
    %606 = vmatpush1.msra.mxu0 %v212
    %607 = vmatprep.subr.mxu0 %v217
    %608 = vmatpush1.msra.mxu0 %v216
    %609 = vmatprep.subr.mxu0 %v221
    %610 = vmatpush1.msra.mxu0 %v220
    %611 = vmatprep.subr.mxu0 %v225
    %612 = vmatpush1.msra.mxu0 %v224
    %613 = vmatprep.subr.mxu0 %v229
    %614 = vmatpush1.msra.mxu0 %v228
    %615 = vmatprep.subr.mxu0 %v233
    %616 = vmatpush1.msra.mxu0 %v232
    %617 = vmatprep.subr.mxu0 %v237
    %618 = vmatpush1.msra.mxu0 %v236
    %619 = vmatprep.subr.mxu0 %v241
    %620 = vmatpush1.msra.mxu0 %v240
    %621 = vmatprep.subr.mxu0 %v245
    %622 = vmatpush1.msra.mxu0 %v244
    %623 = vmatprep.mubr.f32.mxu0 %v543
    %624 = vmatmul.mubr.f32.gmra.mrb[0].mxu0 %v535
    %v625 = vpop.f32.mrb[0].mxu0
    %v626 = vadd.f32 %v509, %v625
    %v627 = vpop.f32.mrb[0].mxu0
    %v628 = vadd.f32 %v513, %v627
    %629 = vdwg.mxu0
    %630 = vmatprep.subr.mxu0 %v249
    %631 = vmatpush1.msra.mxu0 %v248
    %632 = vmatprep.subr.mxu0 %v253
    %633 = vmatpush1.msra.mxu0 %v252
    %634 = vmatprep.subr.mxu0 %v257
    %635 = vmatpush1.msra.mxu0 %v256
    %636 = vmatprep.subr.mxu0 %v261
    %637 = vmatpush1.msra.mxu0 %v260
    %638 = vmatprep.subr.mxu0 %v265
    %639 = vmatpush1.msra.mxu0 %v264
    %640 = vmatprep.subr.mxu0 %v269
    %641 = vmatpush1.msra.mxu0 %v268
    %642 = vmatprep.subr.mxu0 %v273
    %643 = vmatpush1.msra.mxu0 %v272
    %644 = vmatprep.subr.mxu0 %v277
    %645 = vmatpush1.msra.mxu0 %v276
    %646 = vmatprep.subr.mxu0 %v281
    %647 = vmatpush1.msra.mxu0 %v280
    %648 = vmatprep.subr.mxu0 %v285
    %649 = vmatpush1.msra.mxu0 %v284
    %650 = vmatprep.subr.mxu0 %v289
    %651 = vmatpush1.msra.mxu0 %v288
    %652 = vmatprep.subr.mxu0 %v293
    %653 = vmatpush1.msra.mxu0 %v292
    %654 = vmatprep.subr.mxu0 %v297
    %655 = vmatpush1.msra.mxu0 %v296
    %656 = vmatprep.subr.mxu0 %v301
    %657 = vmatpush1.msra.mxu0 %v300
    %658 = vmatprep.subr.mxu0 %v305
    %659 = vmatpush1.msra.mxu0 %v304
    %660 = vmatprep.subr.mxu0 %v309
    %661 = vmatpush1.msra.mxu0 %v308
    %662 = vmatprep.subr.mxu0 %v313
    %663 = vmatpush1.msra.mxu0 %v312
    %664 = vmatprep.subr.mxu0 %v317
    %665 = vmatpush1.msra.mxu0 %v316
    %666 = vmatprep.subr.mxu0 %v321
    %667 = vmatpush1.msra.mxu0 %v320
    %668 = vmatprep.subr.mxu0 %v325
    %669 = vmatpush1.msra.mxu0 %v324
    %670 = vmatprep.subr.mxu0 %v329
    %671 = vmatpush1.msra.mxu0 %v328
    %672 = vmatprep.subr.mxu0 %v333
    %673 = vmatpush1.msra.mxu0 %v332
    %674 = vmatprep.subr.mxu0 %v337
    %675 = vmatpush1.msra.mxu0 %v336
    %676 = vmatprep.subr.mxu0 %v341
    %677 = vmatpush1.msra.mxu0 %v340
    %678 = vmatprep.subr.mxu0 %v345
    %679 = vmatpush1.msra.mxu0 %v344
    %680 = vmatprep.subr.mxu0 %v349
    %681 = vmatpush1.msra.mxu0 %v348
    %682 = vmatprep.subr.mxu0 %v353
    %683 = vmatpush1.msra.mxu0 %v352
    %684 = vmatprep.subr.mxu0 %v357
    %685 = vmatpush1.msra.mxu0 %v356
    %686 = vmatprep.subr.mxu0 %v361
    %687 = vmatpush1.msra.mxu0 %v360
    %688 = vmatprep.subr.mxu0 %v365
    %689 = vmatpush1.msra.mxu0 %v364
    %690 = vmatprep.subr.mxu0 %v369
    %691 = vmatpush1.msra.mxu0 %v368
    %692 = vmatprep.subr.mxu0 %v373
    %693 = vmatpush1.msra.mxu0 %v372
    %694 = vmatprep.mubr.f32.mxu0 %v544
    %695 = vmatmul.mubr.f32.gmra.mrb[0].mxu0 %v542
    %v696 = vpop.f32.mrb[0].mxu0
    %v697 = vadd.f32 %v626, %v696
    %v698 = vpop.f32.mrb[0].mxu0
    %v699 = vadd.f32 %v628, %v698
    %700 = vdwg.mxu0
    %701 = vmatprep.subr.mxu0 %v377
    %702 = vmatpush1.msra.mxu0 %v376
    %703 = vmatprep.subr.mxu0 %v381
    %704 = vmatpush1.msra.mxu0 %v380
    %705 = vmatprep.subr.mxu0 %v385
    %706 = vmatpush1.msra.mxu0 %v384
    %707 = vmatprep.subr.mxu0 %v389
    %708 = vmatpush1.msra.mxu0 %v388
    %709 = vmatprep.subr.mxu0 %v393
    %710 = vmatpush1.msra.mxu0 %v392
    %711 = vmatprep.subr.mxu0 %v397
    %712 = vmatpush1.msra.mxu0 %v396
    %713 = vmatprep.subr.mxu0 %v401
    %714 = vmatpush1.msra.mxu0 %v400
    %715 = vmatprep.subr.mxu0 %v405
    %716 = vmatpush1.msra.mxu0 %v404
    %717 = vmatprep.subr.mxu0 %v409
    %718 = vmatpush1.msra.mxu0 %v408
    %719 = vmatprep.subr.mxu0 %v413
    %720 = vmatpush1.msra.mxu0 %v412
    %721 = vmatprep.subr.mxu0 %v417
    %722 = vmatpush1.msra.mxu0 %v416
    %723 = vmatprep.subr.mxu0 %v421
    %724 = vmatpush1.msra.mxu0 %v420
    %725 = vmatprep.subr.mxu0 %v425
    %726 = vmatpush1.msra.mxu0 %v424
    %727 = vmatprep.subr.mxu0 %v429
    %728 = vmatpush1.msra.mxu0 %v428
    %729 = vmatprep.subr.mxu0 %v433
    %730 = vmatpush1.msra.mxu0 %v432
    %731 = vmatprep.subr.mxu0 %v437
    %732 = vmatpush1.msra.mxu0 %v436
    %733 = vmatprep.subr.mxu0 %v441
    %734 = vmatpush1.msra.mxu0 %v440
    %735 = vmatprep.subr.mxu0 %v445
    %736 = vmatpush1.msra.mxu0 %v444
    %737 = vmatprep.subr.mxu0 %v449
    %738 = vmatpush1.msra.mxu0 %v448
    %739 = vmatprep.subr.mxu0 %v453
    %740 = vmatpush1.msra.mxu0 %v452
    %741 = vmatprep.subr.mxu0 %v457
    %742 = vmatpush1.msra.mxu0 %v456
    %743 = vmatprep.subr.mxu0 %v461
    %744 = vmatpush1.msra.mxu0 %v460
    %745 = vmatprep.subr.mxu0 %v465
    %746 = vmatpush1.msra.mxu0 %v464
    %747 = vmatprep.subr.mxu0 %v469
    %748 = vmatpush1.msra.mxu0 %v468
    %749 = vmatprep.subr.mxu0 %v473
    %750 = vmatpush1.msra.mxu0 %v472
    %751 = vmatprep.subr.mxu0 %v477
    %752 = vmatpush1.msra.mxu0 %v476
    %753 = vmatprep.subr.mxu0 %v481
    %754 = vmatpush1.msra.mxu0 %v480
    %755 = vmatprep.subr.mxu0 %v485
    %756 = vmatpush1.msra.mxu0 %v484
    %757 = vmatprep.subr.mxu0 %v489
    %758 = vmatpush1.msra.mxu0 %v488
    %759 = vmatprep.subr.mxu0 %v493
    %760 = vmatpush1.msra.mxu0 %v492
    %761 = vmatprep.subr.mxu0 %v497
    %762 = vmatpush1.msra.mxu0 %v496
    %763 = vmatprep.subr.mxu0 %v501
    %764 = vmatpush1.msra.mxu0 %v500
    %765 = vmatprep.mubr.f32.mxu0 %v552
    %766 = vmatmul.mubr.f32.gmra.mrb[0].mxu0 %v551
    %v767 = vpop.f32.mrb[0].mxu0
    %v768 = vadd.f32 %v697, %v767
    %v769 = vpop.f32.mrb[0].mxu0
    %v770 = vadd.f32 %v699, %v769
    %771 = vdwg.mxu0
    %772 = vmatprep.subr.mxu0 %v123
    %773 = vmatpush1.msra.mxu0 %v122
    %774 = vmatprep.subr.mxu0 %v127
    %775 = vmatpush1.msra.mxu0 %v126
    %776 = vmatprep.subr.mxu0 %v131
    %777 = vmatpush1.msra.mxu0 %v130
    %778 = vmatprep.subr.mxu0 %v135
    %779 = vmatpush1.msra.mxu0 %v134
    %780 = vmatprep.subr.mxu0 %v139
    %781 = vmatpush1.msra.mxu0 %v138
    %782 = vmatprep.subr.mxu0 %v143
    %783 = vmatpush1.msra.mxu0 %v142
    %784 = vmatprep.subr.mxu0 %v147
    %785 = vmatpush1.msra.mxu0 %v146
    %786 = vmatprep.subr.mxu0 %v151
    %787 = vmatpush1.msra.mxu0 %v150
    %788 = vmatprep.subr.mxu0 %v155
    %789 = vmatpush1.msra.mxu0 %v154
    %790 = vmatprep.subr.mxu0 %v159
    %791 = vmatpush1.msra.mxu0 %v158
    %792 = vmatprep.subr.mxu0 %v163
    %793 = vmatpush1.msra.mxu0 %v162
    %794 = vmatprep.subr.mxu0 %v167
    %795 = vmatpush1.msra.mxu0 %v166
    %796 = vmatprep.subr.mxu0 %v171
    %797 = vmatpush1.msra.mxu0 %v170
    %798 = vmatprep.subr.mxu0 %v175
    %799 = vmatpush1.msra.mxu0 %v174
    %800 = vmatprep.subr.mxu0 %v179
    %801 = vmatpush1.msra.mxu0 %v178
    %802 = vmatprep.subr.mxu0 %v183
    %803 = vmatpush1.msra.mxu0 %v182
    %804 = vmatprep.subr.mxu0 %v187
    %805 = vmatpush1.msra.mxu0 %v186
    %806 = vmatprep.subr.mxu0 %v191
    %807 = vmatpush1.msra.mxu0 %v190
    %808 = vmatprep.subr.mxu0 %v195
    %809 = vmatpush1.msra.mxu0 %v194
    %810 = vmatprep.subr.mxu0 %v199
    %811 = vmatpush1.msra.mxu0 %v198
    %812 = vmatprep.subr.mxu0 %v203
    %813 = vmatpush1.msra.mxu0 %v202
    %814 = vmatprep.subr.mxu0 %v207
    %815 = vmatpush1.msra.mxu0 %v206
    %816 = vmatprep.subr.mxu0 %v211
    %817 = vmatpush1.msra.mxu0 %v210
    %818 = vmatprep.subr.mxu0 %v215
    %819 = vmatpush1.msra.mxu0 %v214
    %820 = vmatprep.subr.mxu0 %v219
    %821 = vmatpush1.msra.mxu0 %v218
    %822 = vmatprep.subr.mxu0 %v223
    %823 = vmatpush1.msra.mxu0 %v222
    %824 = vmatprep.subr.mxu0 %v227
    %825 = vmatpush1.msra.mxu0 %v226
    %826 = vmatprep.subr.mxu0 %v231
    %827 = vmatpush1.msra.mxu0 %v230
    %828 = vmatprep.subr.mxu0 %v235
    %829 = vmatpush1.msra.mxu0 %v234
    %830 = vmatprep.subr.mxu0 %v239
    %831 = vmatpush1.msra.mxu0 %v238
    %832 = vmatprep.subr.mxu0 %v243
    %833 = vmatpush1.msra.mxu0 %v242
    %834 = vmatprep.subr.mxu0 %v247
    %835 = vmatpush1.msra.mxu0 %v246
    %836 = vmatprep.mubr.f32.mxu0 %v543
    %837 = vmatmul.mubr.f32.gmra.mrb[0].mxu0 %v535
    %v838 = vpop.f32.mrb[0].mxu0
    %v839 = vadd.f32 %v517, %v838
    %v840 = vpop.f32.mrb[0].mxu0
    %v841 = vadd.f32 %v521, %v840
    %842 = vdwg.mxu0
    %843 = vmatprep.subr.mxu0 %v251
    %844 = vmatpush1.msra.mxu0 %v250
    %845 = vmatprep.subr.mxu0 %v255
    %846 = vmatpush1.msra.mxu0 %v254
    %847 = vmatprep.subr.mxu0 %v259
    %848 = vmatpush1.msra.mxu0 %v258
    %849 = vmatprep.subr.mxu0 %v263
    %850 = vmatpush1.msra.mxu0 %v262
    %851 = vmatprep.subr.mxu0 %v267
    %852 = vmatpush1.msra.mxu0 %v266
    %853 = vmatprep.subr.mxu0 %v271
    %854 = vmatpush1.msra.mxu0 %v270
    %855 = vmatprep.subr.mxu0 %v275
    %856 = vmatpush1.msra.mxu0 %v274
    %857 = vmatprep.subr.mxu0 %v279
    %858 = vmatpush1.msra.mxu0 %v278
    %859 = vmatprep.subr.mxu0 %v283
    %860 = vmatpush1.msra.mxu0 %v282
    %861 = vmatprep.subr.mxu0 %v287
    %862 = vmatpush1.msra.mxu0 %v286
    %863 = vmatprep.subr.mxu0 %v291
    %864 = vmatpush1.msra.mxu0 %v290
    %865 = vmatprep.subr.mxu0 %v295
    %866 = vmatpush1.msra.mxu0 %v294
    %867 = vmatprep.subr.mxu0 %v299
    %868 = vmatpush1.msra.mxu0 %v298
    %869 = vmatprep.subr.mxu0 %v303
    %870 = vmatpush1.msra.mxu0 %v302
    %871 = vmatprep.subr.mxu0 %v307
    %872 = vmatpush1.msra.mxu0 %v306
    %873 = vmatprep.subr.mxu0 %v311
    %874 = vmatpush1.msra.mxu0 %v310
    %875 = vmatprep.subr.mxu0 %v315
    %876 = vmatpush1.msra.mxu0 %v314
    %877 = vmatprep.subr.mxu0 %v319
    %878 = vmatpush1.msra.mxu0 %v318
    %879 = vmatprep.subr.mxu0 %v323
    %880 = vmatpush1.msra.mxu0 %v322
    %881 = vmatprep.subr.mxu0 %v327
    %882 = vmatpush1.msra.mxu0 %v326
    %883 = vmatprep.subr.mxu0 %v331
    %884 = vmatpush1.msra.mxu0 %v330
    %885 = vmatprep.subr.mxu0 %v335
    %886 = vmatpush1.msra.mxu0 %v334
    %887 = vmatprep.subr.mxu0 %v339
    %888 = vmatpush1.msra.mxu0 %v338
    %889 = vmatprep.subr.mxu0 %v343
    %890 = vmatpush1.msra.mxu0 %v342
    %891 = vmatprep.subr.mxu0 %v347
    %892 = vmatpush1.msra.mxu0 %v346
    %893 = vmatprep.subr.mxu0 %v351
    %894 = vmatpush1.msra.mxu0 %v350
    %895 = vmatprep.subr.mxu0 %v355
    %896 = vmatpush1.msra.mxu0 %v354
    %897 = vmatprep.subr.mxu0 %v359
    %898 = vmatpush1.msra.mxu0 %v358
    %899 = vmatprep.subr.mxu0 %v363
    %900 = vmatpush1.msra.mxu0 %v362
    %901 = vmatprep.subr.mxu0 %v367
    %902 = vmatpush1.msra.mxu0 %v366
    %903 = vmatprep.subr.mxu0 %v371
    %904 = vmatpush1.msra.mxu0 %v370
    %905 = vmatprep.subr.mxu0 %v375
    %906 = vmatpush1.msra.mxu0 %v374
    %907 = vmatprep.mubr.f32.mxu0 %v544
    %908 = vmatmul.mubr.f32.gmra.mrb[0].mxu0 %v542
    %v909 = vpop.f32.mrb[0].mxu0
    %v910 = vadd.f32 %v839, %v909
    %v911 = vpop.f32.mrb[0].mxu0
    %v912 = vadd.f32 %v841, %v911
    %913 = vdwg.mxu0
    %914 = vmatprep.subr.mxu0 %v379
    %915 = vmatpush1.msra.mxu0 %v378
    %916 = vmatprep.subr.mxu0 %v383
    %917 = vmatpush1.msra.mxu0 %v382
    %918 = vmatprep.subr.mxu0 %v387
    %919 = vmatpush1.msra.mxu0 %v386
    %920 = vmatprep.subr.mxu0 %v391
    %921 = vmatpush1.msra.mxu0 %v390
    %922 = vmatprep.subr.mxu0 %v395
    %923 = vmatpush1.msra.mxu0 %v394
    %924 = vmatprep.subr.mxu0 %v399
    %925 = vmatpush1.msra.mxu0 %v398
    %926 = vmatprep.subr.mxu0 %v403
    %927 = vmatpush1.msra.mxu0 %v402
    %928 = vmatprep.subr.mxu0 %v407
    %929 = vmatpush1.msra.mxu0 %v406
    %930 = vmatprep.subr.mxu0 %v411
    %931 = vmatpush1.msra.mxu0 %v410
    %932 = vmatprep.subr.mxu0 %v415
    %933 = vmatpush1.msra.mxu0 %v414
    %934 = vmatprep.subr.mxu0 %v419
    %935 = vmatpush1.msra.mxu0 %v418
    %936 = vmatprep.subr.mxu0 %v423
    %937 = vmatpush1.msra.mxu0 %v422
    %938 = vmatprep.subr.mxu0 %v427
    %939 = vmatpush1.msra.mxu0 %v426
    %940 = vmatprep.subr.mxu0 %v431
    %941 = vmatpush1.msra.mxu0 %v430
    %942 = vmatprep.subr.mxu0 %v435
    %943 = vmatpush1.msra.mxu0 %v434
    %944 = vmatprep.subr.mxu0 %v439
    %945 = vmatpush1.msra.mxu0 %v438
    %946 = vmatprep.subr.mxu0 %v443
    %947 = vmatpush1.msra.mxu0 %v442
    %948 = vmatprep.subr.mxu0 %v447
    %949 = vmatpush1.msra.mxu0 %v446
    %950 = vmatprep.subr.mxu0 %v451
    %951 = vmatpush1.msra.mxu0 %v450
    %952 = vmatprep.subr.mxu0 %v455
    %953 = vmatpush1.msra.mxu0 %v454
    %954 = vmatprep.subr.mxu0 %v459
    %955 = vmatpush1.msra.mxu0 %v458
    %956 = vmatprep.subr.mxu0 %v463
    %957 = vmatpush1.msra.mxu0 %v462
    %958 = vmatprep.subr.mxu0 %v467
    %959 = vmatpush1.msra.mxu0 %v466
    %960 = vmatprep.subr.mxu0 %v471
    %961 = vmatpush1.msra.mxu0 %v470
    %962 = vmatprep.subr.mxu0 %v475
    %963 = vmatpush1.msra.mxu0 %v474
    %964 = vmatprep.subr.mxu0 %v479
    %965 = vmatpush1.msra.mxu0 %v478
    %966 = vmatprep.subr.mxu0 %v483
    %967 = vmatpush1.msra.mxu0 %v482
    %968 = vmatprep.subr.mxu0 %v487
    %969 = vmatpush1.msra.mxu0 %v486
    %970 = vmatprep.subr.mxu0 %v491
    %971 = vmatpush1.msra.mxu0 %v490
    %972 = vmatprep.subr.mxu0 %v495
    %973 = vmatpush1.msra.mxu0 %v494
    %974 = vmatprep.subr.mxu0 %v499
    %975 = vmatpush1.msra.mxu0 %v498
    %976 = vmatprep.subr.mxu0 %v503
    %977 = vmatpush1.msra.mxu0 %v502
    %978 = vmatprep.mubr.f32.mxu0 %v552
    %979 = vmatmul.mubr.f32.gmra.mrb[0].mxu0 %v551
    %v980 = vpop.f32.mrb[0].mxu0
    %v981 = vadd.f32 %v910, %v980
    %v982 = vpop.f32.mrb[0].mxu0
    %v983 = vadd.f32 %v912, %v982
    %984 = vdwg.mxu0
    %vm985 = vcmp.ge.f32.partialorder %v768, 0.0
    %vm986 = vcmp.ge.f32.partialorder %v770, 0.0
    %vm987 = vcmp.ge.f32.partialorder %v981, 0.0
    %vm988 = vcmp.ge.f32.partialorder %v983, 0.0
    %v989 = vmul.f32 %v768, 0.01
    %v990 = vmul.f32 %v770, 0.01
    %v991 = vmul.f32 %v981, 0.01
    %v992 = vmul.f32 %v983, 0.01
    %v993 = vsel %vm985, %v768, %v989
    %v994 = vsel %vm986, %v770, %v990
    %v995 = vsel %vm987, %v981, %v991
    %v996 = vsel %vm988, %v983, %v992
    %v997 = vld [vmem:[#allocation6] sm:$0xff]
    %v998 = vld [vmem:[#allocation6 + $0x8] sm:$0xff]
    %v999 = vld [vmem:[#allocation6 + $0x10] sm:$0xff]
    %v1000 = vld [vmem:[#allocation6 + $0x18] sm:$0xff]
    %v1001 = vld [vmem:[#allocation6 + $0x20] sm:$0xff]
    %v1002 = vld [vmem:[#allocation6 + $0x28] sm:$0xff]
    %v1003 = vld [vmem:[#allocation6 + $0x30] sm:$0xff]
    %v1004 = vld [vmem:[#allocation6 + $0x38] sm:$0xff]
    %v1005 = vld [vmem:[#allocation6 + $0x40] sm:$0xff]
    %v1006 = vld [vmem:[#allocation6 + $0x48] sm:$0xff]
    %v1007 = vld [vmem:[#allocation6 + $0x50] sm:$0xff]
    %v1008 = vld [vmem:[#allocation6 + $0x58] sm:$0xff]
    %v1009 = vld [vmem:[#allocation6 + $0x60] sm:$0xff]
    %v1010 = vld [vmem:[#allocation6 + $0x68] sm:$0xff]
    %v1011 = vld [vmem:[#allocation6 + $0x70] sm:$0xff]
    %v1012 = vld [vmem:[#allocation6 + $0x78] sm:$0xff]
    %v1013 = vld [vmem:[#allocation6 + $0x80] sm:$0xff]
    %v1014 = vld [vmem:[#allocation6 + $0x88] sm:$0xff]
    %v1015 = vld [vmem:[#allocation6 + $0x90] sm:$0xff]
    %v1016 = vld [vmem:[#allocation6 + $0x98] sm:$0xff]
    %v1017 = vld [vmem:[#allocation6 + $0xa0] sm:$0xff]
    %v1018 = vld [vmem:[#allocation6 + $0xa8] sm:$0xff]
    %v1019 = vld [vmem:[#allocation6 + $0xb0] sm:$0xff]
    %v1020 = vld [vmem:[#allocation6 + $0xb8] sm:$0xff]
    %v1021 = vld [vmem:[#allocation6 + $0xc0] sm:$0xff]
    %v1022 = vld [vmem:[#allocation6 + $0xc8] sm:$0xff]
    %v1023 = vld [vmem:[#allocation6 + $0xd0] sm:$0xff]
    %v1024 = vld [vmem:[#allocation6 + $0xd8] sm:$0xff]
    %v1025 = vld [vmem:[#allocation6 + $0xe0] sm:$0xff]
    %v1026 = vld [vmem:[#allocation6 + $0xe8] sm:$0xff]
    %v1027 = vld [vmem:[#allocation6 + $0xf0] sm:$0xff]
    %v1028 = vld [vmem:[#allocation6 + $0xf8] sm:$0xff]
    %v1029 = vld [vmem:[#allocation6 + $0x100] sm:$0xff]
    %v1030 = vld [vmem:[#allocation6 + $0x108] sm:$0xff]
    %v1031 = vld [vmem:[#allocation6 + $0x110] sm:$0xff]
    %v1032 = vld [vmem:[#allocation6 + $0x118] sm:$0xff]
    %v1033 = vld [vmem:[#allocation6 + $0x120] sm:$0xff]
    %v1034 = vld [vmem:[#allocation6 + $0x128] sm:$0xff]
    %v1035 = vld [vmem:[#allocation6 + $0x130] sm:$0xff]
    %v1036 = vld [vmem:[#allocation6 + $0x138] sm:$0xff]
    %v1037 = vld [vmem:[#allocation6 + $0x140] sm:$0xff]
    %v1038 = vld [vmem:[#allocation6 + $0x148] sm:$0xff]
    %v1039 = vld [vmem:[#allocation6 + $0x150] sm:$0xff]
    %v1040 = vld [vmem:[#allocation6 + $0x158] sm:$0xff]
    %v1041 = vld [vmem:[#allocation6 + $0x160] sm:$0xff]
    %v1042 = vld [vmem:[#allocation6 + $0x168] sm:$0xff]
    %v1043 = vld [vmem:[#allocation6 + $0x170] sm:$0xff]
    %v1044 = vld [vmem:[#allocation6 + $0x178] sm:$0xff]
    %v1045 = vld [vmem:[#allocation6 + $0x180] sm:$0xff]
    %v1046 = vld [vmem:[#allocation6 + $0x188] sm:$0xff]
    %v1047 = vld [vmem:[#allocation6 + $0x190] sm:$0xff]
    %v1048 = vld [vmem:[#allocation6 + $0x198] sm:$0xff]
    %v1049 = vld [vmem:[#allocation6 + $0x1a0] sm:$0xff]
    %v1050 = vld [vmem:[#allocation6 + $0x1a8] sm:$0xff]
    %v1051 = vld [vmem:[#allocation6 + $0x1b0] sm:$0xff]
    %v1052 = vld [vmem:[#allocation6 + $0x1b8] sm:$0xff]
    %v1053 = vld [vmem:[#allocation6 + $0x1c0] sm:$0xff]
    %v1054 = vld [vmem:[#allocation6 + $0x1c8] sm:$0xff]
    %v1055 = vld [vmem:[#allocation6 + $0x1d0] sm:$0xff]
    %v1056 = vld [vmem:[#allocation6 + $0x1d8] sm:$0xff]
    %v1057 = vld [vmem:[#allocation6 + $0x1e0] sm:$0xff]
    %v1058 = vld [vmem:[#allocation6 + $0x1e8] sm:$0xff]
    %v1059 = vld [vmem:[#allocation6 + $0x1f0] sm:$0xff]
    %v1060 = vld [vmem:[#allocation6 + $0x1f8] sm:$0xff]
    %v1061 = vld [vmem:[#allocation6 + $0x200] sm:$0xff]
    %v1062 = vld [vmem:[#allocation6 + $0x208] sm:$0xff]
    %v1063 = vld [vmem:[#allocation6 + $0x210] sm:$0xff]
    %v1064 = vld [vmem:[#allocation6 + $0x218] sm:$0xff]
    %v1065 = vld [vmem:[#allocation6 + $0x220] sm:$0xff]
    %v1066 = vld [vmem:[#allocation6 + $0x228] sm:$0xff]
    %v1067 = vld [vmem:[#allocation6 + $0x230] sm:$0xff]
    %v1068 = vld [vmem:[#allocation6 + $0x238] sm:$0xff]
    %v1069 = vld [vmem:[#allocation6 + $0x240] sm:$0xff]
    %v1070 = vld [vmem:[#allocation6 + $0x248] sm:$0xff]
    %v1071 = vld [vmem:[#allocation6 + $0x250] sm:$0xff]
    %v1072 = vld [vmem:[#allocation6 + $0x258] sm:$0xff]
    %v1073 = vld [vmem:[#allocation6 + $0x260] sm:$0xff]
    %v1074 = vld [vmem:[#allocation6 + $0x268] sm:$0xff]
    %v1075 = vld [vmem:[#allocation6 + $0x270] sm:$0xff]
    %v1076 = vld [vmem:[#allocation6 + $0x278] sm:$0xff]
    %v1077 = vld [vmem:[#allocation6 + $0x280] sm:$0xff]
    %v1078 = vld [vmem:[#allocation6 + $0x288] sm:$0xff]
    %v1079 = vld [vmem:[#allocation6 + $0x290] sm:$0xff]
    %v1080 = vld [vmem:[#allocation6 + $0x298] sm:$0xff]
    %v1081 = vld [vmem:[#allocation6 + $0x2a0] sm:$0xff]
    %v1082 = vld [vmem:[#allocation6 + $0x2a8] sm:$0xff]
    %v1083 = vld [vmem:[#allocation6 + $0x2b0] sm:$0xff]
    %v1084 = vld [vmem:[#allocation6 + $0x2b8] sm:$0xff]
    %v1085 = vld [vmem:[#allocation6 + $0x2c0] sm:$0xff]
    %v1086 = vld [vmem:[#allocation6 + $0x2c8] sm:$0xff]
    %v1087 = vld [vmem:[#allocation6 + $0x2d0] sm:$0xff]
    %v1088 = vld [vmem:[#allocation6 + $0x2d8] sm:$0xff]
    %v1089 = vld [vmem:[#allocation6 + $0x2e0] sm:$0xff]
    %v1090 = vld [vmem:[#allocation6 + $0x2e8] sm:$0xff]
    %v1091 = vld [vmem:[#allocation6 + $0x2f0] sm:$0xff]
    %v1092 = vld [vmem:[#allocation6 + $0x2f8] sm:$0xff]
    %v1093 = vld [vmem:[#allocation6 + $0x300] sm:$0xff]
    %v1094 = vld [vmem:[#allocation6 + $0x308] sm:$0xff]
    %v1095 = vld [vmem:[#allocation6 + $0x310] sm:$0xff]
    %v1096 = vld [vmem:[#allocation6 + $0x318] sm:$0xff]
    %v1097 = vld [vmem:[#allocation6 + $0x320] sm:$0xff]
    %v1098 = vld [vmem:[#allocation6 + $0x328] sm:$0xff]
    %v1099 = vld [vmem:[#allocation6 + $0x330] sm:$0xff]
    %v1100 = vld [vmem:[#allocation6 + $0x338] sm:$0xff]
    %v1101 = vld [vmem:[#allocation6 + $0x340] sm:$0xff]
    %v1102 = vld [vmem:[#allocation6 + $0x348] sm:$0xff]
    %v1103 = vld [vmem:[#allocation6 + $0x350] sm:$0xff]
    %v1104 = vld [vmem:[#allocation6 + $0x358] sm:$0xff]
    %v1105 = vld [vmem:[#allocation6 + $0x360] sm:$0xff]
    %v1106 = vld [vmem:[#allocation6 + $0x368] sm:$0xff]
    %v1107 = vld [vmem:[#allocation6 + $0x370] sm:$0xff]
    %v1108 = vld [vmem:[#allocation6 + $0x378] sm:$0xff]
    %v1109 = vld [vmem:[#allocation6 + $0x380] sm:$0xff]
    %v1110 = vld [vmem:[#allocation6 + $0x388] sm:$0xff]
    %v1111 = vld [vmem:[#allocation6 + $0x390] sm:$0xff]
    %v1112 = vld [vmem:[#allocation6 + $0x398] sm:$0xff]
    %v1113 = vld [vmem:[#allocation6 + $0x3a0] sm:$0xff]
    %v1114 = vld [vmem:[#allocation6 + $0x3a8] sm:$0xff]
    %v1115 = vld [vmem:[#allocation6 + $0x3b0] sm:$0xff]
    %v1116 = vld [vmem:[#allocation6 + $0x3b8] sm:$0xff]
    %v1117 = vld [vmem:[#allocation6 + $0x3c0] sm:$0xff]
    %v1118 = vld [vmem:[#allocation6 + $0x3c8] sm:$0xff]
    %v1119 = vld [vmem:[#allocation6 + $0x3d0] sm:$0xff]
    %v1120 = vld [vmem:[#allocation6 + $0x3d8] sm:$0xff]
    %v1121 = vld [vmem:[#allocation6 + $0x3e0] sm:$0xff]
    %v1122 = vld [vmem:[#allocation6 + $0x3e8] sm:$0xff]
    %v1123 = vld [vmem:[#allocation6 + $0x3f0] sm:$0xff]
    %v1124 = vld [vmem:[#allocation6 + $0x3f8] sm:$0xff]
    %v1125 = vld [vmem:[#allocation7] sm:$0x3]
    %v1127 = vlaneseq
    %v1128 = vshrl.u32 %v1127, 7
    %v1129 = vsub.s32 0, %v1128
    %v1130 = vrot.slane %v1125, %v1129
    %v1131 = vlaneseq
    %v1132 = vshrl.u32 %v1131, 7
    %v1133 = vsub.s32 1, %v1132
    %v1134 = vrot.slane %v1125, %v1133
    %1137 = vmatprep.subr.mxu0 %v998
    %1138 = vmatpush1.msra.mxu0 %v997
    %1139 = vmatprep.subr.mxu0 %v1000
    %1140 = vmatpush1.msra.mxu0 %v999
    %1141 = vmatprep.subr.mxu0 %v1002
    %1142 = vmatpush1.msra.mxu0 %v1001
    %1143 = vmatprep.subr.mxu0 %v1004
    %1144 = vmatpush1.msra.mxu0 %v1003
    %1145 = vmatprep.subr.mxu0 %v1006
    %1146 = vmatpush1.msra.mxu0 %v1005
    %1147 = vmatprep.subr.mxu0 %v1008
    %1148 = vmatpush1.msra.mxu0 %v1007
    %1149 = vmatprep.subr.mxu0 %v1010
    %1150 = vmatpush1.msra.mxu0 %v1009
    %1151 = vmatprep.subr.mxu0 %v1012
    %1152 = vmatpush1.msra.mxu0 %v1011
    %1153 = vmatprep.subr.mxu0 %v1014
    %1154 = vmatpush1.msra.mxu0 %v1013
    %1155 = vmatprep.subr.mxu0 %v1016
    %1156 = vmatpush1.msra.mxu0 %v1015
    %1157 = vmatprep.subr.mxu0 %v1018
    %1158 = vmatpush1.msra.mxu0 %v1017
    %1159 = vmatprep.subr.mxu0 %v1020
    %1160 = vmatpush1.msra.mxu0 %v1019
    %1161 = vmatprep.subr.mxu0 %v1022
    %1162 = vmatpush1.msra.mxu0 %v1021
    %1163 = vmatprep.subr.mxu0 %v1024
    %1164 = vmatpush1.msra.mxu0 %v1023
    %1165 = vmatprep.subr.mxu0 %v1026
    %1166 = vmatpush1.msra.mxu0 %v1025
    %1167 = vmatprep.subr.mxu0 %v1028
    %1168 = vmatpush1.msra.mxu0 %v1027
    %1169 = vmatprep.subr.mxu0 %v1030
    %1170 = vmatpush1.msra.mxu0 %v1029
    %1171 = vmatprep.subr.mxu0 %v1032
    %1172 = vmatpush1.msra.mxu0 %v1031
    %1173 = vmatprep.subr.mxu0 %v1034
    %1174 = vmatpush1.msra.mxu0 %v1033
    %1175 = vmatprep.subr.mxu0 %v1036
    %1176 = vmatpush1.msra.mxu0 %v1035
    %1177 = vmatprep.subr.mxu0 %v1038
    %1178 = vmatpush1.msra.mxu0 %v1037
    %1179 = vmatprep.subr.mxu0 %v1040
    %1180 = vmatpush1.msra.mxu0 %v1039
    %1181 = vmatprep.subr.mxu0 %v1042
    %1182 = vmatpush1.msra.mxu0 %v1041
    %1183 = vmatprep.subr.mxu0 %v1044
    %1184 = vmatpush1.msra.mxu0 %v1043
    %1185 = vmatprep.subr.mxu0 %v1046
    %1186 = vmatpush1.msra.mxu0 %v1045
    %1187 = vmatprep.subr.mxu0 %v1048
    %1188 = vmatpush1.msra.mxu0 %v1047
    %1189 = vmatprep.subr.mxu0 %v1050
    %1190 = vmatpush1.msra.mxu0 %v1049
    %1191 = vmatprep.subr.mxu0 %v1052
    %1192 = vmatpush1.msra.mxu0 %v1051
    %1193 = vmatprep.subr.mxu0 %v1054
    %1194 = vmatpush1.msra.mxu0 %v1053
    %1195 = vmatprep.subr.mxu0 %v1056
    %1196 = vmatpush1.msra.mxu0 %v1055
    %1197 = vmatprep.subr.mxu0 %v1058
    %1198 = vmatpush1.msra.mxu0 %v1057
    %1199 = vmatprep.subr.mxu0 %v1060
    %1200 = vmatpush1.msra.mxu0 %v1059
    %1201 = vmatprep.mubr.f32.mxu0 %v994
    %1202 = vmatmul.mubr.f32.gmra.mrb[0].mxu0 %v993
    %v1203 = vpop.f32.mrb[0].mxu0
    %v1204 = vadd.f32 %v1130, %v1203
    %v1205 = vpop.f32.mrb[0].mxu0
    %v1206 = vadd.f32 %v1134, %v1205
    %1207 = vdwg.mxu0
    %1208 = vmatprep.subr.mxu0 %v1062
    %1209 = vmatpush1.msra.mxu0 %v1061
    %1210 = vmatprep.subr.mxu0 %v1064
    %1211 = vmatpush1.msra.mxu0 %v1063
    %1212 = vmatprep.subr.mxu0 %v1066
    %1213 = vmatpush1.msra.mxu0 %v1065
    %1214 = vmatprep.subr.mxu0 %v1068
    %1215 = vmatpush1.msra.mxu0 %v1067
    %1216 = vmatprep.subr.mxu0 %v1070
    %1217 = vmatpush1.msra.mxu0 %v1069
    %1218 = vmatprep.subr.mxu0 %v1072
    %1219 = vmatpush1.msra.mxu0 %v1071
    %1220 = vmatprep.subr.mxu0 %v1074
    %1221 = vmatpush1.msra.mxu0 %v1073
    %1222 = vmatprep.subr.mxu0 %v1076
    %1223 = vmatpush1.msra.mxu0 %v1075
    %1224 = vmatprep.subr.mxu0 %v1078
    %1225 = vmatpush1.msra.mxu0 %v1077
    %1226 = vmatprep.subr.mxu0 %v1080
    %1227 = vmatpush1.msra.mxu0 %v1079
    %1228 = vmatprep.subr.mxu0 %v1082
    %1229 = vmatpush1.msra.mxu0 %v1081
    %1230 = vmatprep.subr.mxu0 %v1084
    %1231 = vmatpush1.msra.mxu0 %v1083
    %1232 = vmatprep.subr.mxu0 %v1086
    %1233 = vmatpush1.msra.mxu0 %v1085
    %1234 = vmatprep.subr.mxu0 %v1088
    %1235 = vmatpush1.msra.mxu0 %v1087
    %1236 = vmatprep.subr.mxu0 %v1090
    %1237 = vmatpush1.msra.mxu0 %v1089
    %1238 = vmatprep.subr.mxu0 %v1092
    %1239 = vmatpush1.msra.mxu0 %v1091
    %1240 = vmatprep.subr.mxu0 %v1094
    %1241 = vmatpush1.msra.mxu0 %v1093
    %1242 = vmatprep.subr.mxu0 %v1096
    %1243 = vmatpush1.msra.mxu0 %v1095
    %1244 = vmatprep.subr.mxu0 %v1098
    %1245 = vmatpush1.msra.mxu0 %v1097
    %1246 = vmatprep.subr.mxu0 %v1100
    %1247 = vmatpush1.msra.mxu0 %v1099
    %1248 = vmatprep.subr.mxu0 %v1102
    %1249 = vmatpush1.msra.mxu0 %v1101
    %1250 = vmatprep.subr.mxu0 %v1104
    %1251 = vmatpush1.msra.mxu0 %v1103
    %1252 = vmatprep.subr.mxu0 %v1106
    %1253 = vmatpush1.msra.mxu0 %v1105
    %1254 = vmatprep.subr.mxu0 %v1108
    %1255 = vmatpush1.msra.mxu0 %v1107
    %1256 = vmatprep.subr.mxu0 %v1110
    %1257 = vmatpush1.msra.mxu0 %v1109
    %1258 = vmatprep.subr.mxu0 %v1112
    %1259 = vmatpush1.msra.mxu0 %v1111
    %1260 = vmatprep.subr.mxu0 %v1114
    %1261 = vmatpush1.msra.mxu0 %v1113
    %1262 = vmatprep.subr.mxu0 %v1116
    %1263 = vmatpush1.msra.mxu0 %v1115
    %1264 = vmatprep.subr.mxu0 %v1118
    %1265 = vmatpush1.msra.mxu0 %v1117
    %1266 = vmatprep.subr.mxu0 %v1120
    %1267 = vmatpush1.msra.mxu0 %v1119
    %1268 = vmatprep.subr.mxu0 %v1122
    %1269 = vmatpush1.msra.mxu0 %v1121
    %1270 = vmatprep.subr.mxu0 %v1124
    %1271 = vmatpush1.msra.mxu0 %v1123
    %1272 = vmatprep.mubr.f32.mxu0 %v996
    %1273 = vmatmul.mubr.f32.gmra.mrb[0].mxu0 %v995
    %v1274 = vpop.f32.mrb[0].mxu0
    %v1275 = vadd.f32 %v1204, %v1274
    %v1276 = vpop.f32.mrb[0].mxu0
    %v1277 = vadd.f32 %v1206, %v1276
    %1278 = vdwg.mxu0
    %vm1279 = vcmp.ge.f32.partialorder %v1275, 0.0
    %vm1280 = vcmp.ge.f32.partialorder %v1277, 0.0
    %v1281 = vmul.f32 %v1275, 0.01
    %v1282 = vmul.f32 %v1277, 0.01
    %v1283 = vsel %vm1279, %v1275, %v1281
    %v1284 = vsel %vm1280, %v1277, %v1282
    %v1285 = vld [vmem:[#allocation9] sm:$0xff]
    %v1286 = vld [vmem:[#allocation9 + $0x8] sm:$0xff]
    %v1287 = vld [vmem:[#allocation9 + $0x10] sm:$0xff]
    %v1288 = vld [vmem:[#allocation9 + $0x18] sm:$0xff]
    %v1289 = vld [vmem:[#allocation9 + $0x20] sm:$0xff]
    %v1290 = vld [vmem:[#allocation9 + $0x28] sm:$0xff]
    %v1291 = vld [vmem:[#allocation9 + $0x30] sm:$0xff]
    %v1292 = vld [vmem:[#allocation9 + $0x38] sm:$0xff]
    %v1293 = vld [vmem:[#allocation9 + $0x40] sm:$0xff]
    %v1294 = vld [vmem:[#allocation9 + $0x48] sm:$0xff]
    %v1295 = vld [vmem:[#allocation9 + $0x50] sm:$0xff]
    %v1296 = vld [vmem:[#allocation9 + $0x58] sm:$0xff]
    %v1297 = vld [vmem:[#allocation9 + $0x60] sm:$0xff]
    %v1298 = vld [vmem:[#allocation9 + $0x68] sm:$0xff]
    %v1299 = vld [vmem:[#allocation9 + $0x70] sm:$0xff]
    %v1300 = vld [vmem:[#allocation9 + $0x78] sm:$0xff]
    %v1301 = vld [vmem:[#allocation9 + $0x80] sm:$0xff]
    %v1302 = vld [vmem:[#allocation9 + $0x88] sm:$0xff]
    %v1303 = vld [vmem:[#allocation9 + $0x90] sm:$0xff]
    %v1304 = vld [vmem:[#allocation9 + $0x98] sm:$0xff]
    %v1305 = vld [vmem:[#allocation9 + $0xa0] sm:$0xff]
    %v1306 = vld [vmem:[#allocation9 + $0xa8] sm:$0xff]
    %v1307 = vld [vmem:[#allocation9 + $0xb0] sm:$0xff]
    %v1308 = vld [vmem:[#allocation9 + $0xb8] sm:$0xff]
    %v1309 = vld [vmem:[#allocation9 + $0xc0] sm:$0xff]
    %v1310 = vld [vmem:[#allocation9 + $0xc8] sm:$0xff]
    %v1311 = vld [vmem:[#allocation9 + $0xd0] sm:$0xff]
    %v1312 = vld [vmem:[#allocation9 + $0xd8] sm:$0xff]
    %v1313 = vld [vmem:[#allocation9 + $0xe0] sm:$0xff]
    %v1314 = vld [vmem:[#allocation9 + $0xe8] sm:$0xff]
    %v1315 = vld [vmem:[#allocation9 + $0xf0] sm:$0xff]
    %v1316 = vld [vmem:[#allocation9 + $0xf8] sm:$0xff]
    %v1317 = vld [vmem:[#allocation10] sm:$0x1]
    %v1319 = vlaneseq
    %v1320 = vshrl.u32 %v1319, 7
    %v1321 = vsub.s32 0, %v1320
    %v1322 = vrot.slane %v1317, %v1321
    %1324 = vmatprep.subr.mxu0 0.0
    %1325 = vmatpush1.msra.mxu0 %v1285
    %1326 = vmatprep.subr.mxu0 0.0
    %1327 = vmatpush1.msra.mxu0 %v1286
    %1328 = vmatprep.subr.mxu0 0.0
    %1329 = vmatpush1.msra.mxu0 %v1287
    %1330 = vmatprep.subr.mxu0 0.0
    %1331 = vmatpush1.msra.mxu0 %v1288
    %1332 = vmatprep.subr.mxu0 0.0
    %1333 = vmatpush1.msra.mxu0 %v1289
    %1334 = vmatprep.subr.mxu0 0.0
    %1335 = vmatpush1.msra.mxu0 %v1290
    %1336 = vmatprep.subr.mxu0 0.0
    %1337 = vmatpush1.msra.mxu0 %v1291
    %1338 = vmatprep.subr.mxu0 0.0
    %1339 = vmatpush1.msra.mxu0 %v1292
    %1340 = vmatprep.subr.mxu0 0.0
    %1341 = vmatpush1.msra.mxu0 %v1293
    %1342 = vmatprep.subr.mxu0 0.0
    %1343 = vmatpush1.msra.mxu0 %v1294
    %1344 = vmatprep.subr.mxu0 0.0
    %1345 = vmatpush1.msra.mxu0 %v1295
    %1346 = vmatprep.subr.mxu0 0.0
    %1347 = vmatpush1.msra.mxu0 %v1296
    %1348 = vmatprep.subr.mxu0 0.0
    %1349 = vmatpush1.msra.mxu0 %v1297
    %1350 = vmatprep.subr.mxu0 0.0
    %1351 = vmatpush1.msra.mxu0 %v1298
    %1352 = vmatprep.subr.mxu0 0.0
    %1353 = vmatpush1.msra.mxu0 %v1299
    %1354 = vmatprep.subr.mxu0 0.0
    %1355 = vmatpush1.msra.mxu0 %v1300
    %1356 = vmatprep.subr.mxu0 0.0
    %1357 = vmatpush1.msra.mxu0 %v1301
    %1358 = vmatprep.subr.mxu0 0.0
    %1359 = vmatpush1.msra.mxu0 %v1302
    %1360 = vmatprep.subr.mxu0 0.0
    %1361 = vmatpush1.msra.mxu0 %v1303
    %1362 = vmatprep.subr.mxu0 0.0
    %1363 = vmatpush1.msra.mxu0 %v1304
    %1364 = vmatprep.subr.mxu0 0.0
    %1365 = vmatpush1.msra.mxu0 %v1305
    %1366 = vmatprep.subr.mxu0 0.0
    %1367 = vmatpush1.msra.mxu0 %v1306
    %1368 = vmatprep.subr.mxu0 0.0
    %1369 = vmatpush1.msra.mxu0 %v1307
    %1370 = vmatprep.subr.mxu0 0.0
    %1371 = vmatpush1.msra.mxu0 %v1308
    %1372 = vmatprep.subr.mxu0 0.0
    %1373 = vmatpush1.msra.mxu0 %v1309
    %1374 = vmatprep.subr.mxu0 0.0
    %1375 = vmatpush1.msra.mxu0 %v1310
    %1376 = vmatprep.subr.mxu0 0.0
    %1377 = vmatpush1.msra.mxu0 %v1311
    %1378 = vmatprep.subr.mxu0 0.0
    %1379 = vmatpush1.msra.mxu0 %v1312
    %1380 = vmatprep.subr.mxu0 0.0
    %1381 = vmatpush1.msra.mxu0 %v1313
    %1382 = vmatprep.subr.mxu0 0.0
    %1383 = vmatpush1.msra.mxu0 %v1314
    %1384 = vmatprep.subr.mxu0 0.0
    %1385 = vmatpush1.msra.mxu0 %v1315
    %1386 = vmatprep.subr.mxu0 0.0
    %1387 = vmatpush1.msra.mxu0 %v1316
    %1388 = vmatprep.mubr.f32.mxu0 %v1284
    %1389 = vmatmul.mubr.f32.gmra.mrb[0].mxu0 %v1283
    %v1390 = vpop.f32.mrb[0].mxu0
    %v1391 = vadd.f32 %v1322, %v1390
    %v1392 = vpop.f32.mrb[0].mxu0
    %1393 = vdwg.mxu0
    %vm1394 = vcmp.ge.f32.partialorder %v1391, 0.0
    %v1395 = vmul.f32 %v1391, 0.01
    %v1396 = vsel %vm1394, %v1391, %v1395
    %v1397 = vld [vmem:[#allocation12] sm:$0xff]
    %v1398 = vld [vmem:[#allocation12 + $0x8] sm:$0xff]
    %v1399 = vld [vmem:[#allocation12 + $0x10] sm:$0xff]
    %v1400 = vld [vmem:[#allocation12 + $0x18] sm:$0xff]
    %v1401 = vld [vmem:[#allocation12 + $0x20] sm:$0xff]
    %v1402 = vld [vmem:[#allocation12 + $0x28] sm:$0xff]
    %v1403 = vld [vmem:[#allocation12 + $0x30] sm:$0xff]
    %v1404 = vld [vmem:[#allocation12 + $0x38] sm:$0xff]
    %v1405 = vld [vmem:[#allocation12 + $0x40] sm:$0xff]
    %v1406 = vld [vmem:[#allocation12 + $0x48] sm:$0xff]
    %v1407 = vld [vmem:[#allocation12 + $0x50] sm:$0xff]
    %v1408 = vld [vmem:[#allocation12 + $0x58] sm:$0xff]
    %v1409 = vld [vmem:[#allocation12 + $0x60] sm:$0xff]
    %v1410 = vld [vmem:[#allocation12 + $0x68] sm:$0xff]
    %v1411 = vld [vmem:[#allocation12 + $0x70] sm:$0xff]
    %v1412 = vld [vmem:[#allocation12 + $0x78] sm:$0xff]
    %1413 = vmatprep.subr.mxu0 0.0
    %1414 = vmatpush1.msra.mxu0 %v1397
    %1415 = vmatprep.subr.mxu0 0.0
    %1416 = vmatpush1.msra.mxu0 %v1398
    %1417 = vmatprep.subr.mxu0 0.0
    %1418 = vmatpush1.msra.mxu0 %v1399
    %1419 = vmatprep.subr.mxu0 0.0
    %1420 = vmatpush1.msra.mxu0 %v1400
    %1421 = vmatprep.subr.mxu0 0.0
    %1422 = vmatpush1.msra.mxu0 %v1401
    %1423 = vmatprep.subr.mxu0 0.0
    %1424 = vmatpush1.msra.mxu0 %v1402
    %1425 = vmatprep.subr.mxu0 0.0
    %1426 = vmatpush1.msra.mxu0 %v1403
    %1427 = vmatprep.subr.mxu0 0.0
    %1428 = vmatpush1.msra.mxu0 %v1404
    %1429 = vmatprep.subr.mxu0 0.0
    %1430 = vmatpush1.msra.mxu0 %v1405
    %1431 = vmatprep.subr.mxu0 0.0
    %1432 = vmatpush1.msra.mxu0 %v1406
    %1433 = vmatprep.subr.mxu0 0.0
    %1434 = vmatpush1.msra.mxu0 %v1407
    %1435 = vmatprep.subr.mxu0 0.0
    %1436 = vmatpush1.msra.mxu0 %v1408
    %1437 = vmatprep.subr.mxu0 0.0
    %1438 = vmatpush1.msra.mxu0 %v1409
    %1439 = vmatprep.subr.mxu0 0.0
    %1440 = vmatpush1.msra.mxu0 %v1410
    %1441 = vmatprep.subr.mxu0 0.0
    %1442 = vmatpush1.msra.mxu0 %v1411
    %1443 = vmatprep.subr.mxu0 0.0
    %1444 = vmatpush1.msra.mxu0 %v1412
    %1445 = vmatprep.subr.mxu0 0.0
    %1446 = vmatpush1.msra.mxu0 0.0
    %1447 = vmatprep.subr.mxu0 0.0
    %1448 = vmatpush1.msra.mxu0 0.0
    %1449 = vmatprep.subr.mxu0 0.0
    %1450 = vmatpush1.msra.mxu0 0.0
    %1451 = vmatprep.subr.mxu0 0.0
    %1452 = vmatpush1.msra.mxu0 0.0
    %1453 = vmatprep.subr.mxu0 0.0
    %1454 = vmatpush1.msra.mxu0 0.0
    %1455 = vmatprep.subr.mxu0 0.0
    %1456 = vmatpush1.msra.mxu0 0.0
    %1457 = vmatprep.subr.mxu0 0.0
    %1458 = vmatpush1.msra.mxu0 0.0
    %1459 = vmatprep.subr.mxu0 0.0
    %1460 = vmatpush1.msra.mxu0 0.0
    %1461 = vmatprep.subr.mxu0 0.0
    %1462 = vmatpush1.msra.mxu0 0.0
    %1463 = vmatprep.subr.mxu0 0.0
    %1464 = vmatpush1.msra.mxu0 0.0
    %1465 = vmatprep.subr.mxu0 0.0
    %1466 = vmatpush1.msra.mxu0 0.0
    %1467 = vmatprep.subr.mxu0 0.0
    %1468 = vmatpush1.msra.mxu0 0.0
    %1469 = vmatprep.subr.mxu0 0.0
    %1470 = vmatpush1.msra.mxu0 0.0
    %1471 = vmatprep.subr.mxu0 0.0
    %1472 = vmatpush1.msra.mxu0 0.0
    %1473 = vmatprep.subr.mxu0 0.0
    %1474 = vmatpush1.msra.mxu0 0.0
    %1475 = vmatprep.subr.mxu0 0.0
    %1476 = vmatpush1.msra.mxu0 0.0
    %1477 = vmatprep.mubr.f32.mxu0 0.0
    %1478 = vmatmul.mubr.f32.gmra.mrb[0].mxu0 %v1396
    %v1479 = vpop.f32.mrb[0].mxu0
    %v1480 = vadd.f32 0.0, %v1479
    %v1481 = vpop.f32.mrb[0].mxu0
    %1482 = vdwg.mxu0
    %1483 = vst [vmem:[%s8] sm:$0x3] %v1480
    // Predicated region
    $region62: #{discriminator_forward.1} parent=1 // pred_check
      _
    $region63: #{discriminator_forward.1} parent=1 // pred_check_branch
      %1485 = sbr.rel (0) target = $region65
    $region64: #{discriminator_forward.1} parent=1 // pred_region
      _
    $region65: #{discriminator_forward.1} parent=1 // pred_fallthru
      _
    // Predicated region
    $region66: #{discriminator_forward.1} parent=1 // pred_check
      _
    $region67: #{discriminator_forward.1} parent=1 // pred_check_branch
      %1487 = sbr.rel (0) target = $region69
    $region68: #{discriminator_forward.1} parent=1 // pred_region
      _
    $region69: #{discriminator_forward.1} parent=1 // pred_fallthru
      _
    %1488 = vsyncpa [#allocation3], 1
    %1489 = vsyncpa [#allocation5], 1
    %1490 = vsyncpa [#allocation8], 1
    %1491 = vsyncpa [#allocation11], 1

</llo_original>
